<compile_context>
chip_gen: v7x
topology: tpu7x:2x2x1
jax: 0.10.0
libtpu: 0.0.40
codegen_flags: <defaults>
</compile_context>

<pallas_src>
import jax
import jax.numpy as jnp
from jax.experimental import pallas as pl
from jax.experimental.pallas import tpu as pltpu

B = 4            # batch
C_IN = 256       # conv1 input channels
H = W = 4        # spatial size implied by the 4x4 kernel -> 1x1 output
K1 = C_IN * H * W            # 4096 contraction size for conv1-as-matmul
C_MID = 128      # conv1 output channels
N_DISC = 100     # categorical code logits
N_HEAD = 128     # fused head width: 100 disc + 1 mu + 1 var + 26 zero pad
MU_COL = N_DISC          # 100
VAR_COL = N_DISC + 1     # 101
EPS = 1e-5


def qhead_kernel(x_ref, w1_ref, gamma_ref, beta_ref, wh_ref, bh_ref, out_ref):
    # conv1 (full-contraction 4x4 conv) as one MXU matmul: bf16 operands, f32 acc.
    y = jnp.dot(x_ref[...], w1_ref[...], preferred_element_type=jnp.float32)

    # BatchNorm2d(128), training-mode semantics (batch stats, biased variance).
    # All f32 on the VPU (v5e has no bf16 VPU/EUP).
    mean = jnp.mean(y, axis=0, keepdims=True)                     # (1, 128)
    var = jnp.mean((y - mean) ** 2, axis=0, keepdims=True)        # (1, 128)
    y_hat = (y - mean) * jax.lax.rsqrt(var + EPS)
    y_hat = y_hat * gamma_ref[...] + beta_ref[...]

    # LeakyReLU(0.1)
    h = jnp.where(y_hat > 0, y_hat, 0.1 * y_hat)                  # (B, 128)

    # Fused heads: one (B,128)x(128,128) matmul (disc | mu | var | zero pad).
    head = jnp.dot(h, wh_ref[...], preferred_element_type=jnp.float32) + bh_ref[...]

    # exp only on the var lane; single unmasked lane-dense 128-wide store.
    lane = jax.lax.broadcasted_iota(jnp.int32, head.shape, 1)
    out_ref[...] = jnp.where(lane == VAR_COL, jnp.exp(head), head)


def prepare_params(params):
    """One-time parameter prep, hoisted out of the per-call forward path."""
    w1_t = params["w1"].reshape(C_MID, K1).T.astype(jnp.bfloat16)     # (4096, 128) bf16
    wd_t = params["wd"].reshape(N_DISC, C_MID).T                      # (128, 100)
    wm_t = params["wm"].reshape(1, C_MID).T                           # (128, 1)
    wv_t = params["wv"].reshape(1, C_MID).T                           # (128, 1)
    pad_w = jnp.zeros((C_MID, N_HEAD - N_DISC - 2), jnp.float32)
    w_head = jnp.concatenate([wd_t, wm_t, wv_t, pad_w], axis=1)       # (128, 128) f32
    b_head = jnp.concatenate(
        [params["bd"], params["bm"], params["bv"],
         jnp.zeros((N_HEAD - N_DISC - 2,), jnp.float32)]).reshape(1, N_HEAD)
    return {
        "w1_t": w1_t,
        "gamma": params["gamma"].reshape(1, C_MID).astype(jnp.float32),
        "beta": params["beta"].reshape(1, C_MID).astype(jnp.float32),
        "w_head": w_head,
        "b_head": b_head,
    }


@jax.jit
def qhead_forward(x_nchw, prepped):
    """x_nchw: (B, 256, 4, 4) float32; prepped: output of prepare_params.
    Returns (disc_logits (B,100), mu (B,), var (B,))."""
    b = x_nchw.shape[0]
    # NCHW -> (B, C*H*W) is a contiguous (free) reshape; bf16 for the MXU operand.
    x_flat = x_nchw.reshape(b, K1).astype(jnp.bfloat16)

    vmem = pl.BlockSpec(memory_space=pltpu.MemorySpace.VMEM)
    cost = pl.CostEstimate(
        flops=2 * b * K1 * C_MID + 2 * b * C_MID * N_HEAD,
        transcendentals=b * N_HEAD + C_MID,
        bytes_accessed=(x_flat.size * 2 + prepped["w1_t"].size * 2
                        + prepped["w_head"].size * 4 + prepped["b_head"].size * 4
                        + 2 * C_MID * 4 + b * N_HEAD * 4),
    )
    out = pl.pallas_call(
        qhead_kernel,
        out_shape=jax.ShapeDtypeStruct((b, N_HEAD), jnp.float32),
        in_specs=[vmem] * 6,
        out_specs=vmem,
        cost_estimate=cost,
    )(x_flat, prepped["w1_t"], prepped["gamma"], prepped["beta"],
      prepped["w_head"], prepped["b_head"])

    # .squeeze() semantics of the PyTorch module (B > 1 assumed).
    disc = out[:, :N_DISC]
    mu = out[:, MU_COL]
    var = out[:, VAR_COL]
    return disc, mu, var


# ---------------- pure-JAX references for verification ----------------

def _bn_and_heads(y, params):
    mean = y.mean(axis=0, keepdims=True)
    var = ((y - mean) ** 2).mean(axis=0, keepdims=True)
    y_hat = (y - mean) * jax.lax.rsqrt(var + EPS) * params["gamma"] + params["beta"]
    h = jnp.where(y_hat > 0, y_hat, 0.1 * y_hat)
    disc = h @ params["wd"].reshape(N_DISC, C_MID).T + params["bd"]
    mu = (h @ params["wm"].reshape(1, C_MID).T + params["bm"])[:, 0]
    v = jnp.exp((h @ params["wv"].reshape(1, C_MID).T + params["bv"])[:, 0])
    return disc, mu, v


def qhead_reference_bf16(x_nchw, params):
    """Reference with the same mixed precision as the kernel (bf16 conv1 operands)."""
    b = x_nchw.shape[0]
    x_flat = x_nchw.reshape(b, K1).astype(jnp.bfloat16)
    w1_t = params["w1"].reshape(C_MID, K1).T.astype(jnp.bfloat16)
    y = jnp.dot(x_flat, w1_t, preferred_element_type=jnp.float32)
    return _bn_and_heads(y, params)


def qhead_reference_f32(x_nchw, params):
    """Full-f32 reference matching the PyTorch module's numerics."""
    b = x_nchw.shape[0]
    y = x_nchw.reshape(b, K1) @ params["w1"].reshape(C_MID, K1).T
    return _bn_and_heads(y, params)


def init_params(key):
    ks = jax.random.split(key, 8)
    scale = 0.02
    return {
        "w1": scale * jax.random.normal(ks[0], (C_MID, C_IN, 4, 4), jnp.float32),
        "gamma": 1.0 + 0.1 * jax.random.normal(ks[1], (C_MID,), jnp.float32),
        "beta": 0.1 * jax.random.normal(ks[2], (C_MID,), jnp.float32),
        "wd": scale * jax.random.normal(ks[3], (N_DISC, C_MID, 1, 1), jnp.float32),
        "bd": 0.01 * jax.random.normal(ks[4], (N_DISC,), jnp.float32),
        "wm": scale * jax.random.normal(ks[5], (1, C_MID, 1, 1), jnp.float32),
        "bm": 0.01 * jax.random.normal(ks[6], (1,), jnp.float32),
        "wv": scale * jax.random.normal(ks[7], (1, C_MID, 1, 1), jnp.float32),
        "bv": jnp.zeros((1,), jnp.float32),
    }


if __name__ == "__main__":
    key = jax.random.PRNGKey(0)
    k_x, k_p = jax.random.split(key)
    x = jax.random.normal(k_x, (B, C_IN, H, W), jnp.float32)
    params = init_params(k_p)

    prepped = prepare_params(params)            # one-time prep (not per-call)
    jax.block_until_ready(prepped)

    disc, mu, var = qhead_forward(x, prepped)
    jax.block_until_ready((disc, mu, var))

    assert disc.shape == (B, N_DISC) and mu.shape == (B,) and var.shape == (B,)

    # (1) kernel fidelity vs a reference using the same mixed precision.
    d_b, m_b, v_b = qhead_reference_bf16(x, params)
    assert jnp.allclose(disc, d_b, atol=5e-3, rtol=5e-3)
    assert jnp.allclose(mu, m_b, atol=5e-3, rtol=5e-3)
    assert jnp.allclose(var, v_b, atol=5e-3, rtol=5e-3)

    # (2) fidelity vs the full-f32 (PyTorch-equivalent) reference; bf16 conv1
    #     operands introduce a small, bounded drift.
    d_f, m_f, v_f = qhead_reference_f32(x, params)
    assert jnp.allclose(disc, d_f, atol=2e-2, rtol=2e-2)
    assert jnp.allclose(mu, m_f, atol=2e-2, rtol=2e-2)
    assert jnp.allclose(var, v_f, atol=2e-2, rtol=2e-2)

    print("KERNEL_OK")
</pallas_src>

<mosaic_0001>
module attributes {stable_mosaic.version = 11 : i64} {
  func.func @qhead_kernel(%arg0: memref<4x4096xbf16, #tpu.memory_space<vmem>>, %arg1: memref<4096x128xbf16, #tpu.memory_space<vmem>>, %arg2: memref<1x128xf32, #tpu.memory_space<vmem>>, %arg3: memref<1x128xf32, #tpu.memory_space<vmem>>, %arg4: memref<128x128xf32, #tpu.memory_space<vmem>>, %arg5: memref<1x128xf32, #tpu.memory_space<vmem>>, %arg6: memref<4x128xf32, #tpu.memory_space<vmem>>) attributes {dimension_semantics = [], scalar_prefetch = 0 : i64, scratch_operands = 0 : i64, tpu.core_type = #tpu.core_type<tc>} {
    %c0 = arith.constant 0 : index
    %c0_0 = arith.constant 0 : index
    %0 = vector.load %arg0[%c0, %c0_0] : memref<4x4096xbf16, #tpu.memory_space<vmem>>, vector<4x4096xbf16>
    %c0_1 = arith.constant 0 : index
    %c0_2 = arith.constant 0 : index
    %1 = vector.load %arg1[%c0_1, %c0_2] : memref<4096x128xbf16, #tpu.memory_space<vmem>>, vector<4096x128xbf16>
    %cst = arith.constant dense<0.000000e+00> : vector<4x128xf32>
    %2 = tpu.matmul %0, %1, %cst {dimension_numbers = #tpu.dot_dimension_numbers<[1], [0], [0], [1], [0, 0, 1, 1], [], []>} : vector<4x4096xbf16>, vector<4096x128xbf16>, vector<4x128xf32> -> vector<4x128xf32>
    %cst_3 = arith.constant dense<0.000000e+00> : vector<128xf32>
    %3 = vector.multi_reduction <add>, %2, %cst_3 [0] : vector<4x128xf32> to vector<128xf32>
    %4 = vector.shape_cast %3 : vector<128xf32> to vector<1x128xf32>
    %cst_4 = arith.constant 4.000000e+00 : f32
    %5 = vector.broadcast %cst_4 : f32 to vector<1x128xf32>
    %6 = arith.divf %4, %5 : vector<1x128xf32>
    %7 = vector.broadcast %6 : vector<1x128xf32> to vector<4x128xf32>
    %8 = arith.subf %2, %7 : vector<4x128xf32>
    %9 = arith.mulf %8, %8 : vector<4x128xf32>
    %cst_5 = arith.constant dense<0.000000e+00> : vector<128xf32>
    %10 = vector.multi_reduction <add>, %9, %cst_5 [0] : vector<4x128xf32> to vector<128xf32>
    %11 = vector.shape_cast %10 : vector<128xf32> to vector<1x128xf32>
    %cst_6 = arith.constant 4.000000e+00 : f32
    %12 = vector.broadcast %cst_6 : f32 to vector<1x128xf32>
    %13 = arith.divf %11, %12 : vector<1x128xf32>
    %14 = vector.broadcast %6 : vector<1x128xf32> to vector<4x128xf32>
    %15 = arith.subf %2, %14 : vector<4x128xf32>
    %cst_7 = arith.constant 9.99999974E-6 : f32
    %16 = vector.broadcast %cst_7 : f32 to vector<1x128xf32>
    %17 = arith.addf %13, %16 : vector<1x128xf32>
    %18 = math.rsqrt %17 : vector<1x128xf32>
    %19 = vector.broadcast %18 : vector<1x128xf32> to vector<4x128xf32>
    %20 = arith.mulf %15, %19 : vector<4x128xf32>
    %c0_8 = arith.constant 0 : index
    %c0_9 = arith.constant 0 : index
    %21 = vector.load %arg2[%c0_8, %c0_9] : memref<1x128xf32, #tpu.memory_space<vmem>>, vector<1x128xf32>
    %22 = vector.broadcast %21 : vector<1x128xf32> to vector<4x128xf32>
    %23 = arith.mulf %20, %22 : vector<4x128xf32>
    %c0_10 = arith.constant 0 : index
    %c0_11 = arith.constant 0 : index
    %24 = vector.load %arg3[%c0_10, %c0_11] : memref<1x128xf32, #tpu.memory_space<vmem>>, vector<1x128xf32>
    %25 = vector.broadcast %24 : vector<1x128xf32> to vector<4x128xf32>
    %26 = arith.addf %23, %25 : vector<4x128xf32>
    %cst_12 = arith.constant 0.000000e+00 : f32
    %27 = vector.broadcast %cst_12 : f32 to vector<4x128xf32>
    %28 = arith.cmpf ogt, %26, %27 : vector<4x128xf32>
    %cst_13 = arith.constant 1.000000e-01 : f32
    %29 = vector.broadcast %cst_13 : f32 to vector<4x128xf32>
    %30 = arith.mulf %29, %26 : vector<4x128xf32>
    %31 = arith.select %28, %26, %30 : vector<4x128xi1>, vector<4x128xf32>
    %c0_14 = arith.constant 0 : index
    %c0_15 = arith.constant 0 : index
    %32 = vector.load %arg4[%c0_14, %c0_15] : memref<128x128xf32, #tpu.memory_space<vmem>>, vector<128x128xf32>
    %cst_16 = arith.constant dense<0.000000e+00> : vector<4x128xf32>
    %33 = tpu.matmul %31, %32, %cst_16 {dimension_numbers = #tpu.dot_dimension_numbers<[1], [0], [0], [1], [0, 0, 1, 1], [], []>} : vector<4x128xf32>, vector<128x128xf32>, vector<4x128xf32> -> vector<4x128xf32>
    %c0_17 = arith.constant 0 : index
    %c0_18 = arith.constant 0 : index
    %34 = vector.load %arg5[%c0_17, %c0_18] : memref<1x128xf32, #tpu.memory_space<vmem>>, vector<1x128xf32>
    %35 = vector.broadcast %34 : vector<1x128xf32> to vector<4x128xf32>
    %36 = arith.addf %33, %35 : vector<4x128xf32>
    %37 = tpu.iota {dimensions = array<i32: 1>} : vector<4x128xi32>
    %c101_i32 = arith.constant 101 : i32
    %38 = vector.broadcast %c101_i32 : i32 to vector<4x128xi32>
    %39 = arith.cmpi eq, %37, %38 : vector<4x128xi32>
    %40 = math.exp %36 : vector<4x128xf32>
    %41 = arith.select %39, %40, %36 : vector<4x128xi1>, vector<4x128xf32>
    %c0_19 = arith.constant 0 : index
    %c0_20 = arith.constant 0 : index
    %42 = vector.load %arg6[%c0_19, %c0_20] : memref<4x128xf32, #tpu.memory_space<vmem>>, vector<4x128xf32>
    tpu.vector_store %arg6[%c0_19, %c0_20], %41 {strides = array<i32>} : memref<4x128xf32, #tpu.memory_space<vmem>>, vector<4x128xf32>,
    return
  }
}

</mosaic_0001>

<llo_original>
// kernel: qhead_forward.1
$region0: #{qhead_forward.1}
  #allocation0 [shape = 'u32[]', space=smem, size = 0x4, offset = 0x4, fixed_abs, tag = 'smem constant byte address 0x4 - core index']
  #allocation1 [shape = 'u32[144,128]{1,0:T(1,128)}', space=vmem, size = 0x12000, scoped, tag = 'internal scratch']
  %s0 = inlined_call_operand.vmem [shape: bf16[4,4096], index: 0, kind: input, shape index: {}]
  %s1 = inlined_call_operand.vmem [shape: bf16[4096,128], index: 1, kind: input, shape index: {}]
  %s2 = inlined_call_operand.vmem [shape: f32[1,128], index: 2, kind: input, shape index: {}]
  %s3 = inlined_call_operand.vmem [shape: f32[1,128], index: 3, kind: input, shape index: {}]
  %s4 = inlined_call_operand.vmem [shape: f32[128,128], index: 4, kind: input, shape index: {}]
  %s5 = inlined_call_operand.vmem [shape: f32[1,128], index: 5, kind: input, shape index: {}]
  %s6 = inlined_call_operand.vmem [shape: f32[4,128], index: 6, kind: output, shape index: {}]
  %s7 = sld [smem:[#allocation0]]
  $region34: #{qhead_forward.1} parent=0
    _
  %s9 = ssub.s32 1, %s7
  %s10 = scalar_select 0, %s9, %s7
  // Predicated region
  $region2: #{qhead_forward.1} parent=0 // pred_check
    _
  $region3: #{qhead_forward.1} parent=0 // pred_check_branch
    %12 = sbr.rel (0) target = $region5
  $region4: #{qhead_forward.1} parent=0 // pred_region
    _
  $region5: #{qhead_forward.1} parent=0 // pred_fallthru
    _
  // Predicated region
  $region6: #{qhead_forward.1} parent=0 // pred_check
    _
  $region7: #{qhead_forward.1} parent=0 // pred_check_branch
    %14 = sbr.rel (0) target = $region9
  $region8: #{qhead_forward.1} parent=0 // pred_region
    _
  $region9: #{qhead_forward.1} parent=0 // pred_fallthru
    _
  // Predicated region
  $region10: #{qhead_forward.1} parent=0 // pred_check
    _
  $region11: #{qhead_forward.1} parent=0 // pred_check_branch
    %16 = sbr.rel (0) target = $region13
  $region12: #{qhead_forward.1} parent=0 // pred_region
    _
  $region13: #{qhead_forward.1} parent=0 // pred_fallthru
    _
  // Predicated region
  $region14: #{qhead_forward.1} parent=0 // pred_check
    _
  $region15: #{qhead_forward.1} parent=0 // pred_check_branch
    %18 = sbr.rel (0) target = $region17
  $region16: #{qhead_forward.1} parent=0 // pred_region
    _
  $region17: #{qhead_forward.1} parent=0 // pred_fallthru
    _
  // Predicated region
  $region18: #{qhead_forward.1} parent=0 // pred_check
    _
  $region19: #{qhead_forward.1} parent=0 // pred_check_branch
    %20 = sbr.rel (0) target = $region21
  $region20: #{qhead_forward.1} parent=0 // pred_region
    _
  $region21: #{qhead_forward.1} parent=0 // pred_fallthru
    _
  // Predicated region
  $region22: #{qhead_forward.1} parent=0 // pred_check
    _
  $region23: #{qhead_forward.1} parent=0 // pred_check_branch
    %22 = sbr.rel (0) target = $region25
  $region24: #{qhead_forward.1} parent=0 // pred_region
    _
  $region25: #{qhead_forward.1} parent=0 // pred_fallthru
    _
  %v24 = vld [vmem:[%s0] sm:$0xff]
  %v25 = vld [vmem:[%s0 + $0x8] sm:$0xff]
  %v26 = vld [vmem:[%s0 + $0x10] sm:$0xff]
  %v27 = vld [vmem:[%s0 + $0x18] sm:$0xff]
  %v28 = vld [vmem:[%s0 + $0x20] sm:$0xff]
  %v29 = vld [vmem:[%s0 + $0x28] sm:$0xff]
  %v30 = vld [vmem:[%s0 + $0x30] sm:$0xff]
  %v31 = vld [vmem:[%s0 + $0x38] sm:$0xff]
  %v32 = vld [vmem:[%s1] sm:$0xf]
  %v33 = vld [vmem:[%s1 + $0x4] sm:$0xf]
  %v34 = vld [vmem:[%s1 + $0x8] sm:$0xf]
  %v35 = vld [vmem:[%s1 + $0xc] sm:$0xf]
  %v36 = vld [vmem:[%s1 + $0x10] sm:$0xf]
  %v37 = vld [vmem:[%s1 + $0x14] sm:$0xf]
  %v38 = vld [vmem:[%s1 + $0x18] sm:$0xf]
  %v39 = vld [vmem:[%s1 + $0x1c] sm:$0xf]
  %v40 = vld [vmem:[%s1 + $0x20] sm:$0xf]
  %v41 = vld [vmem:[%s1 + $0x24] sm:$0xf]
  %v42 = vld [vmem:[%s1 + $0x28] sm:$0xf]
  %v43 = vld [vmem:[%s1 + $0x2c] sm:$0xf]
  %v44 = vld [vmem:[%s1 + $0x30] sm:$0xf]
  %v45 = vld [vmem:[%s1 + $0x34] sm:$0xf]
  %v46 = vld [vmem:[%s1 + $0x38] sm:$0xf]
  %v47 = vld [vmem:[%s1 + $0x3c] sm:$0xf]
  %v48 = vld [vmem:[%s1 + $0x40] sm:$0xf]
  %v49 = vld [vmem:[%s1 + $0x44] sm:$0xf]
  %v50 = vld [vmem:[%s1 + $0x48] sm:$0xf]
  %v51 = vld [vmem:[%s1 + $0x4c] sm:$0xf]
  %v52 = vld [vmem:[%s1 + $0x50] sm:$0xf]
  %v53 = vld [vmem:[%s1 + $0x54] sm:$0xf]
  %v54 = vld [vmem:[%s1 + $0x58] sm:$0xf]
  %v55 = vld [vmem:[%s1 + $0x5c] sm:$0xf]
  %v56 = vld [vmem:[%s1 + $0x60] sm:$0xf]
  %v57 = vld [vmem:[%s1 + $0x64] sm:$0xf]
  %v58 = vld [vmem:[%s1 + $0x68] sm:$0xf]
  %v59 = vld [vmem:[%s1 + $0x6c] sm:$0xf]
  %v60 = vld [vmem:[%s1 + $0x70] sm:$0xf]
  %v61 = vld [vmem:[%s1 + $0x74] sm:$0xf]
  %v62 = vld [vmem:[%s1 + $0x78] sm:$0xf]
  %v63 = vld [vmem:[%s1 + $0x7c] sm:$0xf]
  %v64 = vld [vmem:[%s1 + $0x80] sm:$0xf]
  %v65 = vld [vmem:[%s1 + $0x84] sm:$0xf]
  %v66 = vld [vmem:[%s1 + $0x88] sm:$0xf]
  %v67 = vld [vmem:[%s1 + $0x8c] sm:$0xf]
  %v68 = vld [vmem:[%s1 + $0x90] sm:$0xf]
  %v69 = vld [vmem:[%s1 + $0x94] sm:$0xf]
  %v70 = vld [vmem:[%s1 + $0x98] sm:$0xf]
  %v71 = vld [vmem:[%s1 + $0x9c] sm:$0xf]
  %v72 = vld [vmem:[%s1 + $0xa0] sm:$0xf]
  %v73 = vld [vmem:[%s1 + $0xa4] sm:$0xf]
  %v74 = vld [vmem:[%s1 + $0xa8] sm:$0xf]
  %v75 = vld [vmem:[%s1 + $0xac] sm:$0xf]
  %v76 = vld [vmem:[%s1 + $0xb0] sm:$0xf]
  %v77 = vld [vmem:[%s1 + $0xb4] sm:$0xf]
  %v78 = vld [vmem:[%s1 + $0xb8] sm:$0xf]
  %v79 = vld [vmem:[%s1 + $0xbc] sm:$0xf]
  %v80 = vld [vmem:[%s1 + $0xc0] sm:$0xf]
  %v81 = vld [vmem:[%s1 + $0xc4] sm:$0xf]
  %v82 = vld [vmem:[%s1 + $0xc8] sm:$0xf]
  %v83 = vld [vmem:[%s1 + $0xcc] sm:$0xf]
  %v84 = vld [vmem:[%s1 + $0xd0] sm:$0xf]
  %v85 = vld [vmem:[%s1 + $0xd4] sm:$0xf]
  %v86 = vld [vmem:[%s1 + $0xd8] sm:$0xf]
  %v87 = vld [vmem:[%s1 + $0xdc] sm:$0xf]
  %v88 = vld [vmem:[%s1 + $0xe0] sm:$0xf]
  %v89 = vld [vmem:[%s1 + $0xe4] sm:$0xf]
  %v90 = vld [vmem:[%s1 + $0xe8] sm:$0xf]
  %v91 = vld [vmem:[%s1 + $0xec] sm:$0xf]
  %v92 = vld [vmem:[%s1 + $0xf0] sm:$0xf]
  %v93 = vld [vmem:[%s1 + $0xf4] sm:$0xf]
  %v94 = vld [vmem:[%s1 + $0xf8] sm:$0xf]
  %v95 = vld [vmem:[%s1 + $0xfc] sm:$0xf]
  %v96 = vld [vmem:[%s1 + $0x100] sm:$0xf]
  %v97 = vld [vmem:[%s1 + $0x104] sm:$0xf]
  %v98 = vld [vmem:[%s1 + $0x108] sm:$0xf]
  %v99 = vld [vmem:[%s1 + $0x10c] sm:$0xf]
  %v100 = vld [vmem:[%s1 + $0x110] sm:$0xf]
  %v101 = vld [vmem:[%s1 + $0x114] sm:$0xf]
  %v102 = vld [vmem:[%s1 + $0x118] sm:$0xf]
  %v103 = vld [vmem:[%s1 + $0x11c] sm:$0xf]
  %v104 = vld [vmem:[%s1 + $0x120] sm:$0xf]
  %v105 = vld [vmem:[%s1 + $0x124] sm:$0xf]
  %v106 = vld [vmem:[%s1 + $0x128] sm:$0xf]
  %v107 = vld [vmem:[%s1 + $0x12c] sm:$0xf]
  %v108 = vld [vmem:[%s1 + $0x130] sm:$0xf]
  %v109 = vld [vmem:[%s1 + $0x134] sm:$0xf]
  %v110 = vld [vmem:[%s1 + $0x138] sm:$0xf]
  %v111 = vld [vmem:[%s1 + $0x13c] sm:$0xf]
  %v112 = vld [vmem:[%s1 + $0x140] sm:$0xf]
  %v113 = vld [vmem:[%s1 + $0x144] sm:$0xf]
  %v114 = vld [vmem:[%s1 + $0x148] sm:$0xf]
  %v115 = vld [vmem:[%s1 + $0x14c] sm:$0xf]
  %v116 = vld [vmem:[%s1 + $0x150] sm:$0xf]
  %v117 = vld [vmem:[%s1 + $0x154] sm:$0xf]
  %v118 = vld [vmem:[%s1 + $0x158] sm:$0xf]
  %v119 = vld [vmem:[%s1 + $0x15c] sm:$0xf]
  %v120 = vld [vmem:[%s1 + $0x160] sm:$0xf]
  %v121 = vld [vmem:[%s1 + $0x164] sm:$0xf]
  %v122 = vld [vmem:[%s1 + $0x168] sm:$0xf]
  %v123 = vld [vmem:[%s1 + $0x16c] sm:$0xf]
  %v124 = vld [vmem:[%s1 + $0x170] sm:$0xf]
  %v125 = vld [vmem:[%s1 + $0x174] sm:$0xf]
  %v126 = vld [vmem:[%s1 + $0x178] sm:$0xf]
  %v127 = vld [vmem:[%s1 + $0x17c] sm:$0xf]
  %v128 = vld [vmem:[%s1 + $0x180] sm:$0xf]
  %v129 = vld [vmem:[%s1 + $0x184] sm:$0xf]
  %v130 = vld [vmem:[%s1 + $0x188] sm:$0xf]
  %v131 = vld [vmem:[%s1 + $0x18c] sm:$0xf]
  %v132 = vld [vmem:[%s1 + $0x190] sm:$0xf]
  %v133 = vld [vmem:[%s1 + $0x194] sm:$0xf]
  %v134 = vld [vmem:[%s1 + $0x198] sm:$0xf]
  %v135 = vld [vmem:[%s1 + $0x19c] sm:$0xf]
  %v136 = vld [vmem:[%s1 + $0x1a0] sm:$0xf]
  %v137 = vld [vmem:[%s1 + $0x1a4] sm:$0xf]
  %v138 = vld [vmem:[%s1 + $0x1a8] sm:$0xf]
  %v139 = vld [vmem:[%s1 + $0x1ac] sm:$0xf]
  %v140 = vld [vmem:[%s1 + $0x1b0] sm:$0xf]
  %v141 = vld [vmem:[%s1 + $0x1b4] sm:$0xf]
  %v142 = vld [vmem:[%s1 + $0x1b8] sm:$0xf]
  %v143 = vld [vmem:[%s1 + $0x1bc] sm:$0xf]
  %v144 = vld [vmem:[%s1 + $0x1c0] sm:$0xf]
  %v145 = vld [vmem:[%s1 + $0x1c4] sm:$0xf]
  %v146 = vld [vmem:[%s1 + $0x1c8] sm:$0xf]
  %v147 = vld [vmem:[%s1 + $0x1cc] sm:$0xf]
  %v148 = vld [vmem:[%s1 + $0x1d0] sm:$0xf]
  %v149 = vld [vmem:[%s1 + $0x1d4] sm:$0xf]
  %v150 = vld [vmem:[%s1 + $0x1d8] sm:$0xf]
  %v151 = vld [vmem:[%s1 + $0x1dc] sm:$0xf]
  %v152 = vld [vmem:[%s1 + $0x1e0] sm:$0xf]
  %v153 = vld [vmem:[%s1 + $0x1e4] sm:$0xf]
  %v154 = vld [vmem:[%s1 + $0x1e8] sm:$0xf]
  %v155 = vld [vmem:[%s1 + $0x1ec] sm:$0xf]
  %v156 = vld [vmem:[%s1 + $0x1f0] sm:$0xf]
  %v157 = vld [vmem:[%s1 + $0x1f4] sm:$0xf]
  %v158 = vld [vmem:[%s1 + $0x1f8] sm:$0xf]
  %v159 = vld [vmem:[%s1 + $0x1fc] sm:$0xf]
  %v160 = vld [vmem:[%s1 + $0x200] sm:$0xf]
  %v161 = vld [vmem:[%s1 + $0x204] sm:$0xf]
  %v162 = vld [vmem:[%s1 + $0x208] sm:$0xf]
  %v163 = vld [vmem:[%s1 + $0x20c] sm:$0xf]
  %v164 = vld [vmem:[%s1 + $0x210] sm:$0xf]
  %v165 = vld [vmem:[%s1 + $0x214] sm:$0xf]
  %v166 = vld [vmem:[%s1 + $0x218] sm:$0xf]
  %v167 = vld [vmem:[%s1 + $0x21c] sm:$0xf]
  %v168 = vld [vmem:[%s1 + $0x220] sm:$0xf]
  %v169 = vld [vmem:[%s1 + $0x224] sm:$0xf]
  %v170 = vld [vmem:[%s1 + $0x228] sm:$0xf]
  %v171 = vld [vmem:[%s1 + $0x22c] sm:$0xf]
  %v172 = vld [vmem:[%s1 + $0x230] sm:$0xf]
  %v173 = vld [vmem:[%s1 + $0x234] sm:$0xf]
  %v174 = vld [vmem:[%s1 + $0x238] sm:$0xf]
  %v175 = vld [vmem:[%s1 + $0x23c] sm:$0xf]
  %v176 = vld [vmem:[%s1 + $0x240] sm:$0xf]
  %v177 = vld [vmem:[%s1 + $0x244] sm:$0xf]
  %v178 = vld [vmem:[%s1 + $0x248] sm:$0xf]
  %v179 = vld [vmem:[%s1 + $0x24c] sm:$0xf]
  %v180 = vld [vmem:[%s1 + $0x250] sm:$0xf]
  %v181 = vld [vmem:[%s1 + $0x254] sm:$0xf]
  %v182 = vld [vmem:[%s1 + $0x258] sm:$0xf]
  %v183 = vld [vmem:[%s1 + $0x25c] sm:$0xf]
  %v184 = vld [vmem:[%s1 + $0x260] sm:$0xf]
  %v185 = vld [vmem:[%s1 + $0x264] sm:$0xf]
  %v186 = vld [vmem:[%s1 + $0x268] sm:$0xf]
  %v187 = vld [vmem:[%s1 + $0x26c] sm:$0xf]
  %v188 = vld [vmem:[%s1 + $0x270] sm:$0xf]
  %v189 = vld [vmem:[%s1 + $0x274] sm:$0xf]
  %v190 = vld [vmem:[%s1 + $0x278] sm:$0xf]
  %v191 = vld [vmem:[%s1 + $0x27c] sm:$0xf]
  %v192 = vld [vmem:[%s1 + $0x280] sm:$0xf]
  %v193 = vld [vmem:[%s1 + $0x284] sm:$0xf]
  %v194 = vld [vmem:[%s1 + $0x288] sm:$0xf]
  %v195 = vld [vmem:[%s1 + $0x28c] sm:$0xf]
  %v196 = vld [vmem:[%s1 + $0x290] sm:$0xf]
  %v197 = vld [vmem:[%s1 + $0x294] sm:$0xf]
  %v198 = vld [vmem:[%s1 + $0x298] sm:$0xf]
  %v199 = vld [vmem:[%s1 + $0x29c] sm:$0xf]
  %v200 = vld [vmem:[%s1 + $0x2a0] sm:$0xf]
  %v201 = vld [vmem:[%s1 + $0x2a4] sm:$0xf]
  %v202 = vld [vmem:[%s1 + $0x2a8] sm:$0xf]
  %v203 = vld [vmem:[%s1 + $0x2ac] sm:$0xf]
  %v204 = vld [vmem:[%s1 + $0x2b0] sm:$0xf]
  %v205 = vld [vmem:[%s1 + $0x2b4] sm:$0xf]
  %v206 = vld [vmem:[%s1 + $0x2b8] sm:$0xf]
  %v207 = vld [vmem:[%s1 + $0x2bc] sm:$0xf]
  %v208 = vld [vmem:[%s1 + $0x2c0] sm:$0xf]
  %v209 = vld [vmem:[%s1 + $0x2c4] sm:$0xf]
  %v210 = vld [vmem:[%s1 + $0x2c8] sm:$0xf]
  %v211 = vld [vmem:[%s1 + $0x2cc] sm:$0xf]
  %v212 = vld [vmem:[%s1 + $0x2d0] sm:$0xf]
  %v213 = vld [vmem:[%s1 + $0x2d4] sm:$0xf]
  %v214 = vld [vmem:[%s1 + $0x2d8] sm:$0xf]
  %v215 = vld [vmem:[%s1 + $0x2dc] sm:$0xf]
  %v216 = vld [vmem:[%s1 + $0x2e0] sm:$0xf]
  %v217 = vld [vmem:[%s1 + $0x2e4] sm:$0xf]
  %v218 = vld [vmem:[%s1 + $0x2e8] sm:$0xf]
  %v219 = vld [vmem:[%s1 + $0x2ec] sm:$0xf]
  %v220 = vld [vmem:[%s1 + $0x2f0] sm:$0xf]
  %v221 = vld [vmem:[%s1 + $0x2f4] sm:$0xf]
  %v222 = vld [vmem:[%s1 + $0x2f8] sm:$0xf]
  %v223 = vld [vmem:[%s1 + $0x2fc] sm:$0xf]
  %v224 = vld [vmem:[%s1 + $0x300] sm:$0xf]
  %v225 = vld [vmem:[%s1 + $0x304] sm:$0xf]
  %v226 = vld [vmem:[%s1 + $0x308] sm:$0xf]
  %v227 = vld [vmem:[%s1 + $0x30c] sm:$0xf]
  %v228 = vld [vmem:[%s1 + $0x310] sm:$0xf]
  %v229 = vld [vmem:[%s1 + $0x314] sm:$0xf]
  %v230 = vld [vmem:[%s1 + $0x318] sm:$0xf]
  %v231 = vld [vmem:[%s1 + $0x31c] sm:$0xf]
  %v232 = vld [vmem:[%s1 + $0x320] sm:$0xf]
  %v233 = vld [vmem:[%s1 + $0x324] sm:$0xf]
  %v234 = vld [vmem:[%s1 + $0x328] sm:$0xf]
  %v235 = vld [vmem:[%s1 + $0x32c] sm:$0xf]
  %v236 = vld [vmem:[%s1 + $0x330] sm:$0xf]
  %v237 = vld [vmem:[%s1 + $0x334] sm:$0xf]
  %v238 = vld [vmem:[%s1 + $0x338] sm:$0xf]
  %v239 = vld [vmem:[%s1 + $0x33c] sm:$0xf]
  %v240 = vld [vmem:[%s1 + $0x340] sm:$0xf]
  %v241 = vld [vmem:[%s1 + $0x344] sm:$0xf]
  %v242 = vld [vmem:[%s1 + $0x348] sm:$0xf]
  %v243 = vld [vmem:[%s1 + $0x34c] sm:$0xf]
  %v244 = vld [vmem:[%s1 + $0x350] sm:$0xf]
  %v245 = vld [vmem:[%s1 + $0x354] sm:$0xf]
  %v246 = vld [vmem:[%s1 + $0x358] sm:$0xf]
  %v247 = vld [vmem:[%s1 + $0x35c] sm:$0xf]
  %v248 = vld [vmem:[%s1 + $0x360] sm:$0xf]
  %v249 = vld [vmem:[%s1 + $0x364] sm:$0xf]
  %v250 = vld [vmem:[%s1 + $0x368] sm:$0xf]
  %v251 = vld [vmem:[%s1 + $0x36c] sm:$0xf]
  %v252 = vld [vmem:[%s1 + $0x370] sm:$0xf]
  %v253 = vld [vmem:[%s1 + $0x374] sm:$0xf]
  %v254 = vld [vmem:[%s1 + $0x378] sm:$0xf]
  %v255 = vld [vmem:[%s1 + $0x37c] sm:$0xf]
  %v256 = vld [vmem:[%s1 + $0x380] sm:$0xf]
  %v257 = vld [vmem:[%s1 + $0x384] sm:$0xf]
  %v258 = vld [vmem:[%s1 + $0x388] sm:$0xf]
  %v259 = vld [vmem:[%s1 + $0x38c] sm:$0xf]
  %v260 = vld [vmem:[%s1 + $0x390] sm:$0xf]
  %v261 = vld [vmem:[%s1 + $0x394] sm:$0xf]
  %v262 = vld [vmem:[%s1 + $0x398] sm:$0xf]
  %v263 = vld [vmem:[%s1 + $0x39c] sm:$0xf]
  %v264 = vld [vmem:[%s1 + $0x3a0] sm:$0xf]
  %v265 = vld [vmem:[%s1 + $0x3a4] sm:$0xf]
  %v266 = vld [vmem:[%s1 + $0x3a8] sm:$0xf]
  %v267 = vld [vmem:[%s1 + $0x3ac] sm:$0xf]
  %v268 = vld [vmem:[%s1 + $0x3b0] sm:$0xf]
  %v269 = vld [vmem:[%s1 + $0x3b4] sm:$0xf]
  %v270 = vld [vmem:[%s1 + $0x3b8] sm:$0xf]
  %v271 = vld [vmem:[%s1 + $0x3bc] sm:$0xf]
  %v272 = vld [vmem:[%s1 + $0x3c0] sm:$0xf]
  %v273 = vld [vmem:[%s1 + $0x3c4] sm:$0xf]
  %v274 = vld [vmem:[%s1 + $0x3c8] sm:$0xf]
  %v275 = vld [vmem:[%s1 + $0x3cc] sm:$0xf]
  %v276 = vld [vmem:[%s1 + $0x3d0] sm:$0xf]
  %v277 = vld [vmem:[%s1 + $0x3d4] sm:$0xf]
  %v278 = vld [vmem:[%s1 + $0x3d8] sm:$0xf]
  %v279 = vld [vmem:[%s1 + $0x3dc] sm:$0xf]
  %v280 = vld [vmem:[%s1 + $0x3e0] sm:$0xf]
  %v281 = vld [vmem:[%s1 + $0x3e4] sm:$0xf]
  %v282 = vld [vmem:[%s1 + $0x3e8] sm:$0xf]
  %v283 = vld [vmem:[%s1 + $0x3ec] sm:$0xf]
  %v284 = vld [vmem:[%s1 + $0x3f0] sm:$0xf]
  %v285 = vld [vmem:[%s1 + $0x3f4] sm:$0xf]
  %v286 = vld [vmem:[%s1 + $0x3f8] sm:$0xf]
  %v287 = vld [vmem:[%s1 + $0x3fc] sm:$0xf]
  %v288 = vld [vmem:[%s1 + $0x400] sm:$0xf]
  %v289 = vld [vmem:[%s1 + $0x404] sm:$0xf]
  %v290 = vld [vmem:[%s1 + $0x408] sm:$0xf]
  %v291 = vld [vmem:[%s1 + $0x40c] sm:$0xf]
  %v292 = vld [vmem:[%s1 + $0x410] sm:$0xf]
  %v293 = vld [vmem:[%s1 + $0x414] sm:$0xf]
  %v294 = vld [vmem:[%s1 + $0x418] sm:$0xf]
  %v295 = vld [vmem:[%s1 + $0x41c] sm:$0xf]
  %v296 = vld [vmem:[%s1 + $0x420] sm:$0xf]
  %v297 = vld [vmem:[%s1 + $0x424] sm:$0xf]
  %v298 = vld [vmem:[%s1 + $0x428] sm:$0xf]
  %v299 = vld [vmem:[%s1 + $0x42c] sm:$0xf]
  %v300 = vld [vmem:[%s1 + $0x430] sm:$0xf]
  %v301 = vld [vmem:[%s1 + $0x434] sm:$0xf]
  %v302 = vld [vmem:[%s1 + $0x438] sm:$0xf]
  %v303 = vld [vmem:[%s1 + $0x43c] sm:$0xf]
  %v304 = vld [vmem:[%s1 + $0x440] sm:$0xf]
  %v305 = vld [vmem:[%s1 + $0x444] sm:$0xf]
  %v306 = vld [vmem:[%s1 + $0x448] sm:$0xf]
  %v307 = vld [vmem:[%s1 + $0x44c] sm:$0xf]
  %v308 = vld [vmem:[%s1 + $0x450] sm:$0xf]
  %v309 = vld [vmem:[%s1 + $0x454] sm:$0xf]
  %v310 = vld [vmem:[%s1 + $0x458] sm:$0xf]
  %v311 = vld [vmem:[%s1 + $0x45c] sm:$0xf]
  %v312 = vld [vmem:[%s1 + $0x460] sm:$0xf]
  %v313 = vld [vmem:[%s1 + $0x464] sm:$0xf]
  %v314 = vld [vmem:[%s1 + $0x468] sm:$0xf]
  %v315 = vld [vmem:[%s1 + $0x46c] sm:$0xf]
  %v316 = vld [vmem:[%s1 + $0x470] sm:$0xf]
  %v317 = vld [vmem:[%s1 + $0x474] sm:$0xf]
  %v318 = vld [vmem:[%s1 + $0x478] sm:$0xf]
  %v319 = vld [vmem:[%s1 + $0x47c] sm:$0xf]
  %v320 = vld [vmem:[%s1 + $0x480] sm:$0xf]
  %v321 = vld [vmem:[%s1 + $0x484] sm:$0xf]
  %v322 = vld [vmem:[%s1 + $0x488] sm:$0xf]
  %v323 = vld [vmem:[%s1 + $0x48c] sm:$0xf]
  %v324 = vld [vmem:[%s1 + $0x490] sm:$0xf]
  %v325 = vld [vmem:[%s1 + $0x494] sm:$0xf]
  %v326 = vld [vmem:[%s1 + $0x498] sm:$0xf]
  %v327 = vld [vmem:[%s1 + $0x49c] sm:$0xf]
  %v328 = vld [vmem:[%s1 + $0x4a0] sm:$0xf]
  %v329 = vld [vmem:[%s1 + $0x4a4] sm:$0xf]
  %v330 = vld [vmem:[%s1 + $0x4a8] sm:$0xf]
  %v331 = vld [vmem:[%s1 + $0x4ac] sm:$0xf]
  %v332 = vld [vmem:[%s1 + $0x4b0] sm:$0xf]
  %v333 = vld [vmem:[%s1 + $0x4b4] sm:$0xf]
  %v334 = vld [vmem:[%s1 + $0x4b8] sm:$0xf]
  %v335 = vld [vmem:[%s1 + $0x4bc] sm:$0xf]
  %v336 = vld [vmem:[%s1 + $0x4c0] sm:$0xf]
  %v337 = vld [vmem:[%s1 + $0x4c4] sm:$0xf]
  %v338 = vld [vmem:[%s1 + $0x4c8] sm:$0xf]
  %v339 = vld [vmem:[%s1 + $0x4cc] sm:$0xf]
  %v340 = vld [vmem:[%s1 + $0x4d0] sm:$0xf]
  %v341 = vld [vmem:[%s1 + $0x4d4] sm:$0xf]
  %v342 = vld [vmem:[%s1 + $0x4d8] sm:$0xf]
  %v343 = vld [vmem:[%s1 + $0x4dc] sm:$0xf]
  %v344 = vld [vmem:[%s1 + $0x4e0] sm:$0xf]
  %v345 = vld [vmem:[%s1 + $0x4e4] sm:$0xf]
  %v346 = vld [vmem:[%s1 + $0x4e8] sm:$0xf]
  %v347 = vld [vmem:[%s1 + $0x4ec] sm:$0xf]
  %v348 = vld [vmem:[%s1 + $0x4f0] sm:$0xf]
  %v349 = vld [vmem:[%s1 + $0x4f4] sm:$0xf]
  %v350 = vld [vmem:[%s1 + $0x4f8] sm:$0xf]
  %v351 = vld [vmem:[%s1 + $0x4fc] sm:$0xf]
  %v352 = vld [vmem:[%s1 + $0x500] sm:$0xf]
  %v353 = vld [vmem:[%s1 + $0x504] sm:$0xf]
  %v354 = vld [vmem:[%s1 + $0x508] sm:$0xf]
  %v355 = vld [vmem:[%s1 + $0x50c] sm:$0xf]
  %v356 = vld [vmem:[%s1 + $0x510] sm:$0xf]
  %v357 = vld [vmem:[%s1 + $0x514] sm:$0xf]
  %v358 = vld [vmem:[%s1 + $0x518] sm:$0xf]
  %v359 = vld [vmem:[%s1 + $0x51c] sm:$0xf]
  %v360 = vld [vmem:[%s1 + $0x520] sm:$0xf]
  %v361 = vld [vmem:[%s1 + $0x524] sm:$0xf]
  %v362 = vld [vmem:[%s1 + $0x528] sm:$0xf]
  %v363 = vld [vmem:[%s1 + $0x52c] sm:$0xf]
  %v364 = vld [vmem:[%s1 + $0x530] sm:$0xf]
  %v365 = vld [vmem:[%s1 + $0x534] sm:$0xf]
  %v366 = vld [vmem:[%s1 + $0x538] sm:$0xf]
  %v367 = vld [vmem:[%s1 + $0x53c] sm:$0xf]
  %v368 = vld [vmem:[%s1 + $0x540] sm:$0xf]
  %v369 = vld [vmem:[%s1 + $0x544] sm:$0xf]
  %v370 = vld [vmem:[%s1 + $0x548] sm:$0xf]
  %v371 = vld [vmem:[%s1 + $0x54c] sm:$0xf]
  %v372 = vld [vmem:[%s1 + $0x550] sm:$0xf]
  %v373 = vld [vmem:[%s1 + $0x554] sm:$0xf]
  %v374 = vld [vmem:[%s1 + $0x558] sm:$0xf]
  %v375 = vld [vmem:[%s1 + $0x55c] sm:$0xf]
  %v376 = vld [vmem:[%s1 + $0x560] sm:$0xf]
  %v377 = vld [vmem:[%s1 + $0x564] sm:$0xf]
  %v378 = vld [vmem:[%s1 + $0x568] sm:$0xf]
  %v379 = vld [vmem:[%s1 + $0x56c] sm:$0xf]
  %v380 = vld [vmem:[%s1 + $0x570] sm:$0xf]
  %v381 = vld [vmem:[%s1 + $0x574] sm:$0xf]
  %v382 = vld [vmem:[%s1 + $0x578] sm:$0xf]
  %v383 = vld [vmem:[%s1 + $0x57c] sm:$0xf]
  %v384 = vld [vmem:[%s1 + $0x580] sm:$0xf]
  %v385 = vld [vmem:[%s1 + $0x584] sm:$0xf]
  %v386 = vld [vmem:[%s1 + $0x588] sm:$0xf]
  %v387 = vld [vmem:[%s1 + $0x58c] sm:$0xf]
  %v388 = vld [vmem:[%s1 + $0x590] sm:$0xf]
  %v389 = vld [vmem:[%s1 + $0x594] sm:$0xf]
  %v390 = vld [vmem:[%s1 + $0x598] sm:$0xf]
  %v391 = vld [vmem:[%s1 + $0x59c] sm:$0xf]
  %v392 = vld [vmem:[%s1 + $0x5a0] sm:$0xf]
  %v393 = vld [vmem:[%s1 + $0x5a4] sm:$0xf]
  %v394 = vld [vmem:[%s1 + $0x5a8] sm:$0xf]
  %v395 = vld [vmem:[%s1 + $0x5ac] sm:$0xf]
  %v396 = vld [vmem:[%s1 + $0x5b0] sm:$0xf]
  %v397 = vld [vmem:[%s1 + $0x5b4] sm:$0xf]
  %v398 = vld [vmem:[%s1 + $0x5b8] sm:$0xf]
  %v399 = vld [vmem:[%s1 + $0x5bc] sm:$0xf]
  %v400 = vld [vmem:[%s1 + $0x5c0] sm:$0xf]
  %v401 = vld [vmem:[%s1 + $0x5c4] sm:$0xf]
  %v402 = vld [vmem:[%s1 + $0x5c8] sm:$0xf]
  %v403 = vld [vmem:[%s1 + $0x5cc] sm:$0xf]
  %v404 = vld [vmem:[%s1 + $0x5d0] sm:$0xf]
  %v405 = vld [vmem:[%s1 + $0x5d4] sm:$0xf]
  %v406 = vld [vmem:[%s1 + $0x5d8] sm:$0xf]
  %v407 = vld [vmem:[%s1 + $0x5dc] sm:$0xf]
  %v408 = vld [vmem:[%s1 + $0x5e0] sm:$0xf]
  %v409 = vld [vmem:[%s1 + $0x5e4] sm:$0xf]
  %v410 = vld [vmem:[%s1 + $0x5e8] sm:$0xf]
  %v411 = vld [vmem:[%s1 + $0x5ec] sm:$0xf]
  %v412 = vld [vmem:[%s1 + $0x5f0] sm:$0xf]
  %v413 = vld [vmem:[%s1 + $0x5f4] sm:$0xf]
  %v414 = vld [vmem:[%s1 + $0x5f8] sm:$0xf]
  %v415 = vld [vmem:[%s1 + $0x5fc] sm:$0xf]
  %v416 = vld [vmem:[%s1 + $0x600] sm:$0xf]
  %v417 = vld [vmem:[%s1 + $0x604] sm:$0xf]
  %v418 = vld [vmem:[%s1 + $0x608] sm:$0xf]
  %v419 = vld [vmem:[%s1 + $0x60c] sm:$0xf]
  %v420 = vld [vmem:[%s1 + $0x610] sm:$0xf]
  %v421 = vld [vmem:[%s1 + $0x614] sm:$0xf]
  %v422 = vld [vmem:[%s1 + $0x618] sm:$0xf]
  %v423 = vld [vmem:[%s1 + $0x61c] sm:$0xf]
  %v424 = vld [vmem:[%s1 + $0x620] sm:$0xf]
  %v425 = vld [vmem:[%s1 + $0x624] sm:$0xf]
  %v426 = vld [vmem:[%s1 + $0x628] sm:$0xf]
  %v427 = vld [vmem:[%s1 + $0x62c] sm:$0xf]
  %v428 = vld [vmem:[%s1 + $0x630] sm:$0xf]
  %v429 = vld [vmem:[%s1 + $0x634] sm:$0xf]
  %v430 = vld [vmem:[%s1 + $0x638] sm:$0xf]
  %v431 = vld [vmem:[%s1 + $0x63c] sm:$0xf]
  %v432 = vld [vmem:[%s1 + $0x640] sm:$0xf]
  %v433 = vld [vmem:[%s1 + $0x644] sm:$0xf]
  %v434 = vld [vmem:[%s1 + $0x648] sm:$0xf]
  %v435 = vld [vmem:[%s1 + $0x64c] sm:$0xf]
  %v436 = vld [vmem:[%s1 + $0x650] sm:$0xf]
  %v437 = vld [vmem:[%s1 + $0x654] sm:$0xf]
  %v438 = vld [vmem:[%s1 + $0x658] sm:$0xf]
  %v439 = vld [vmem:[%s1 + $0x65c] sm:$0xf]
  %v440 = vld [vmem:[%s1 + $0x660] sm:$0xf]
  %v441 = vld [vmem:[%s1 + $0x664] sm:$0xf]
  %v442 = vld [vmem:[%s1 + $0x668] sm:$0xf]
  %v443 = vld [vmem:[%s1 + $0x66c] sm:$0xf]
  %v444 = vld [vmem:[%s1 + $0x670] sm:$0xf]
  %v445 = vld [vmem:[%s1 + $0x674] sm:$0xf]
  %v446 = vld [vmem:[%s1 + $0x678] sm:$0xf]
  %v447 = vld [vmem:[%s1 + $0x67c] sm:$0xf]
  %v448 = vld [vmem:[%s1 + $0x680] sm:$0xf]
  %v449 = vld [vmem:[%s1 + $0x684] sm:$0xf]
  %v450 = vld [vmem:[%s1 + $0x688] sm:$0xf]
  %v451 = vld [vmem:[%s1 + $0x68c] sm:$0xf]
  %v452 = vld [vmem:[%s1 + $0x690] sm:$0xf]
  %v453 = vld [vmem:[%s1 + $0x694] sm:$0xf]
  %v454 = vld [vmem:[%s1 + $0x698] sm:$0xf]
  %v455 = vld [vmem:[%s1 + $0x69c] sm:$0xf]
  %v456 = vld [vmem:[%s1 + $0x6a0] sm:$0xf]
  %v457 = vld [vmem:[%s1 + $0x6a4] sm:$0xf]
  %v458 = vld [vmem:[%s1 + $0x6a8] sm:$0xf]
  %v459 = vld [vmem:[%s1 + $0x6ac] sm:$0xf]
  %v460 = vld [vmem:[%s1 + $0x6b0] sm:$0xf]
  %v461 = vld [vmem:[%s1 + $0x6b4] sm:$0xf]
  %v462 = vld [vmem:[%s1 + $0x6b8] sm:$0xf]
  %v463 = vld [vmem:[%s1 + $0x6bc] sm:$0xf]
  %v464 = vld [vmem:[%s1 + $0x6c0] sm:$0xf]
  %v465 = vld [vmem:[%s1 + $0x6c4] sm:$0xf]
  %v466 = vld [vmem:[%s1 + $0x6c8] sm:$0xf]
  %v467 = vld [vmem:[%s1 + $0x6cc] sm:$0xf]
  %v468 = vld [vmem:[%s1 + $0x6d0] sm:$0xf]
  %v469 = vld [vmem:[%s1 + $0x6d4] sm:$0xf]
  %v470 = vld [vmem:[%s1 + $0x6d8] sm:$0xf]
  %v471 = vld [vmem:[%s1 + $0x6dc] sm:$0xf]
  %v472 = vld [vmem:[%s1 + $0x6e0] sm:$0xf]
  %v473 = vld [vmem:[%s1 + $0x6e4] sm:$0xf]
  %v474 = vld [vmem:[%s1 + $0x6e8] sm:$0xf]
  %v475 = vld [vmem:[%s1 + $0x6ec] sm:$0xf]
  %v476 = vld [vmem:[%s1 + $0x6f0] sm:$0xf]
  %v477 = vld [vmem:[%s1 + $0x6f4] sm:$0xf]
  %v478 = vld [vmem:[%s1 + $0x6f8] sm:$0xf]
  %v479 = vld [vmem:[%s1 + $0x6fc] sm:$0xf]
  %v480 = vld [vmem:[%s1 + $0x700] sm:$0xf]
  %v481 = vld [vmem:[%s1 + $0x704] sm:$0xf]
  %v482 = vld [vmem:[%s1 + $0x708] sm:$0xf]
  %v483 = vld [vmem:[%s1 + $0x70c] sm:$0xf]
  %v484 = vld [vmem:[%s1 + $0x710] sm:$0xf]
  %v485 = vld [vmem:[%s1 + $0x714] sm:$0xf]
  %v486 = vld [vmem:[%s1 + $0x718] sm:$0xf]
  %v487 = vld [vmem:[%s1 + $0x71c] sm:$0xf]
  %v488 = vld [vmem:[%s1 + $0x720] sm:$0xf]
  %v489 = vld [vmem:[%s1 + $0x724] sm:$0xf]
  %v490 = vld [vmem:[%s1 + $0x728] sm:$0xf]
  %v491 = vld [vmem:[%s1 + $0x72c] sm:$0xf]
  %v492 = vld [vmem:[%s1 + $0x730] sm:$0xf]
  %v493 = vld [vmem:[%s1 + $0x734] sm:$0xf]
  %v494 = vld [vmem:[%s1 + $0x738] sm:$0xf]
  %v495 = vld [vmem:[%s1 + $0x73c] sm:$0xf]
  %v496 = vld [vmem:[%s1 + $0x740] sm:$0xf]
  %v497 = vld [vmem:[%s1 + $0x744] sm:$0xf]
  %v498 = vld [vmem:[%s1 + $0x748] sm:$0xf]
  %v499 = vld [vmem:[%s1 + $0x74c] sm:$0xf]
  %v500 = vld [vmem:[%s1 + $0x750] sm:$0xf]
  %v501 = vld [vmem:[%s1 + $0x754] sm:$0xf]
  %v502 = vld [vmem:[%s1 + $0x758] sm:$0xf]
  %v503 = vld [vmem:[%s1 + $0x75c] sm:$0xf]
  %v504 = vld [vmem:[%s1 + $0x760] sm:$0xf]
  %v505 = vld [vmem:[%s1 + $0x764] sm:$0xf]
  %v506 = vld [vmem:[%s1 + $0x768] sm:$0xf]
  %v507 = vld [vmem:[%s1 + $0x76c] sm:$0xf]
  %v508 = vld [vmem:[%s1 + $0x770] sm:$0xf]
  %v509 = vld [vmem:[%s1 + $0x774] sm:$0xf]
  %v510 = vld [vmem:[%s1 + $0x778] sm:$0xf]
  %v511 = vld [vmem:[%s1 + $0x77c] sm:$0xf]
  %v512 = vld [vmem:[%s1 + $0x780] sm:$0xf]
  %v513 = vld [vmem:[%s1 + $0x784] sm:$0xf]
  %v514 = vld [vmem:[%s1 + $0x788] sm:$0xf]
  %v515 = vld [vmem:[%s1 + $0x78c] sm:$0xf]
  %v516 = vld [vmem:[%s1 + $0x790] sm:$0xf]
  %v517 = vld [vmem:[%s1 + $0x794] sm:$0xf]
  %v518 = vld [vmem:[%s1 + $0x798] sm:$0xf]
  %v519 = vld [vmem:[%s1 + $0x79c] sm:$0xf]
  %v520 = vld [vmem:[%s1 + $0x7a0] sm:$0xf]
  %v521 = vld [vmem:[%s1 + $0x7a4] sm:$0xf]
  %v522 = vld [vmem:[%s1 + $0x7a8] sm:$0xf]
  %v523 = vld [vmem:[%s1 + $0x7ac] sm:$0xf]
  %v524 = vld [vmem:[%s1 + $0x7b0] sm:$0xf]
  %v525 = vld [vmem:[%s1 + $0x7b4] sm:$0xf]
  %v526 = vld [vmem:[%s1 + $0x7b8] sm:$0xf]
  %v527 = vld [vmem:[%s1 + $0x7bc] sm:$0xf]
  %v528 = vld [vmem:[%s1 + $0x7c0] sm:$0xf]
  %v529 = vld [vmem:[%s1 + $0x7c4] sm:$0xf]
  %v530 = vld [vmem:[%s1 + $0x7c8] sm:$0xf]
  %v531 = vld [vmem:[%s1 + $0x7cc] sm:$0xf]
  %v532 = vld [vmem:[%s1 + $0x7d0] sm:$0xf]
  %v533 = vld [vmem:[%s1 + $0x7d4] sm:$0xf]
  %v534 = vld [vmem:[%s1 + $0x7d8] sm:$0xf]
  %v535 = vld [vmem:[%s1 + $0x7dc] sm:$0xf]
  %v536 = vld [vmem:[%s1 + $0x7e0] sm:$0xf]
  %v537 = vld [vmem:[%s1 + $0x7e4] sm:$0xf]
  %v538 = vld [vmem:[%s1 + $0x7e8] sm:$0xf]
  %v539 = vld [vmem:[%s1 + $0x7ec] sm:$0xf]
  %v540 = vld [vmem:[%s1 + $0x7f0] sm:$0xf]
  %v541 = vld [vmem:[%s1 + $0x7f4] sm:$0xf]
  %v542 = vld [vmem:[%s1 + $0x7f8] sm:$0xf]
  %v543 = vld [vmem:[%s1 + $0x7fc] sm:$0xf]
  %v552 = vcombine.high %v24, %v24
  %v554 = vunpack.c.l.s4 1983009808
  %v555 = vunpack.c.0.s8 %v554
  %v556 = vlaneseq
  %v557 = vshrl.u32 %v556, 7
  %v558 = vsub.s32 %v555, %v557
  %v559 = vrot.slane %v24, %v558
  %v561 = vunpack.c.l.s4 1983009808
  %v562 = vunpack.c.0.s8 %v561
  %v563 = vlaneseq
  %v564 = vshrl.u32 %v563, 7
  %v565 = vsub.s32 %v562, %v564
  %v566 = vrot.slane %v552, %v565
  %v567 = vcombine.high %v559, %v559
  %v568 = vcombine.high %v566, %v566
  %v569 = vcombine.high %v25, %v25
  %v571 = vunpack.c.l.s4 1983009808
  %v572 = vunpack.c.0.s8 %v571
  %v573 = vlaneseq
  %v574 = vshrl.u32 %v573, 7
  %v575 = vsub.s32 %v572, %v574
  %v576 = vrot.slane %v25, %v575
  %v578 = vunpack.c.l.s4 1983009808
  %v579 = vunpack.c.0.s8 %v578
  %v580 = vlaneseq
  %v581 = vshrl.u32 %v580, 7
  %v582 = vsub.s32 %v579, %v581
  %v583 = vrot.slane %v569, %v582
  %v584 = vcombine.high %v576, %v576
  %v585 = vcombine.high %v583, %v583
  %v586 = vcombine.high %v26, %v26
  %v588 = vunpack.c.l.s4 1983009808
  %v589 = vunpack.c.0.s8 %v588
  %v590 = vlaneseq
  %v591 = vshrl.u32 %v590, 7
  %v592 = vsub.s32 %v589, %v591
  %v593 = vrot.slane %v26, %v592
  %v595 = vunpack.c.l.s4 1983009808
  %v596 = vunpack.c.0.s8 %v595
  %v597 = vlaneseq
  %v598 = vshrl.u32 %v597, 7
  %v599 = vsub.s32 %v596, %v598
  %v600 = vrot.slane %v586, %v599
  %v601 = vcombine.high %v593, %v593
  %v602 = vcombine.high %v600, %v600
  %v603 = vcombine.high %v27, %v27
  %v605 = vunpack.c.l.s4 1983009808
  %v606 = vunpack.c.0.s8 %v605
  %v607 = vlaneseq
  %v608 = vshrl.u32 %v607, 7
  %v609 = vsub.s32 %v606, %v608
  %v610 = vrot.slane %v27, %v609
  %v612 = vunpack.c.l.s4 1983009808
  %v613 = vunpack.c.0.s8 %v612
  %v614 = vlaneseq
  %v615 = vshrl.u32 %v614, 7
  %v616 = vsub.s32 %v613, %v615
  %v617 = vrot.slane %v603, %v616
  %v618 = vcombine.high %v610, %v610
  %v619 = vcombine.high %v617, %v617
  %v620 = vcombine.high %v28, %v28
  %v622 = vunpack.c.l.s4 1983009808
  %v623 = vunpack.c.0.s8 %v622
  %v624 = vlaneseq
  %v625 = vshrl.u32 %v624, 7
  %v626 = vsub.s32 %v623, %v625
  %v627 = vrot.slane %v28, %v626
  %v629 = vunpack.c.l.s4 1983009808
  %v630 = vunpack.c.0.s8 %v629
  %v631 = vlaneseq
  %v632 = vshrl.u32 %v631, 7
  %v633 = vsub.s32 %v630, %v632
  %v634 = vrot.slane %v620, %v633
  %v635 = vcombine.high %v627, %v627
  %v636 = vcombine.high %v634, %v634
  %v637 = vcombine.high %v29, %v29
  %v639 = vunpack.c.l.s4 1983009808
  %v640 = vunpack.c.0.s8 %v639
  %v641 = vlaneseq
  %v642 = vshrl.u32 %v641, 7
  %v643 = vsub.s32 %v640, %v642
  %v644 = vrot.slane %v29, %v643
  %v646 = vunpack.c.l.s4 1983009808
  %v647 = vunpack.c.0.s8 %v646
  %v648 = vlaneseq
  %v649 = vshrl.u32 %v648, 7
  %v650 = vsub.s32 %v647, %v649
  %v651 = vrot.slane %v637, %v650
  %v652 = vcombine.high %v644, %v644
  %v653 = vcombine.high %v651, %v651
  %v654 = vcombine.high %v30, %v30
  %v656 = vunpack.c.l.s4 1983009808
  %v657 = vunpack.c.0.s8 %v656
  %v658 = vlaneseq
  %v659 = vshrl.u32 %v658, 7
  %v660 = vsub.s32 %v657, %v659
  %v661 = vrot.slane %v30, %v660
  %v663 = vunpack.c.l.s4 1983009808
  %v664 = vunpack.c.0.s8 %v663
  %v665 = vlaneseq
  %v666 = vshrl.u32 %v665, 7
  %v667 = vsub.s32 %v664, %v666
  %v668 = vrot.slane %v654, %v667
  %v669 = vcombine.high %v661, %v661
  %v670 = vcombine.high %v668, %v668
  %v671 = vcombine.high %v31, %v31
  %v673 = vunpack.c.l.s4 1983009808
  %v674 = vunpack.c.0.s8 %v673
  %v675 = vlaneseq
  %v676 = vshrl.u32 %v675, 7
  %v677 = vsub.s32 %v674, %v676
  %v678 = vrot.slane %v31, %v677
  %v680 = vunpack.c.l.s4 1983009808
  %v681 = vunpack.c.0.s8 %v680
  %v682 = vlaneseq
  %v683 = vshrl.u32 %v682, 7
  %v684 = vsub.s32 %v681, %v683
  %v685 = vrot.slane %v671, %v684
  %v686 = vcombine.high %v678, %v678
  %v687 = vcombine.high %v685, %v685
  %v1232 = vunpack.c.l.b16 %v32
  %v1233 = vunpack.c.l.b16 %v33
  %v1234 = vunpack.c.l.b16 %v34
  %v1235 = vunpack.c.l.b16 %v35
  %v1236 = vunpack.c.l.b16 %v36
  %v1237 = vunpack.c.l.b16 %v37
  %v1238 = vunpack.c.l.b16 %v38
  %v1239 = vunpack.c.l.b16 %v39
  %v1240 = vunpack.c.l.b16 %v40
  %v1241 = vunpack.c.l.b16 %v41
  %v1242 = vunpack.c.l.b16 %v42
  %v1243 = vunpack.c.l.b16 %v43
  %v1244 = vunpack.c.l.b16 %v44
  %v1245 = vunpack.c.l.b16 %v45
  %v1246 = vunpack.c.l.b16 %v46
  %v1247 = vunpack.c.l.b16 %v47
  %v1248 = vunpack.c.l.b16 %v48
  %v1249 = vunpack.c.l.b16 %v49
  %v1250 = vunpack.c.l.b16 %v50
  %v1251 = vunpack.c.l.b16 %v51
  %v1252 = vunpack.c.l.b16 %v52
  %v1253 = vunpack.c.l.b16 %v53
  %v1254 = vunpack.c.l.b16 %v54
  %v1255 = vunpack.c.l.b16 %v55
  %v1256 = vunpack.c.l.b16 %v56
  %v1257 = vunpack.c.l.b16 %v57
  %v1258 = vunpack.c.l.b16 %v58
  %v1259 = vunpack.c.l.b16 %v59
  %v1260 = vunpack.c.l.b16 %v60
  %v1261 = vunpack.c.l.b16 %v61
  %v1262 = vunpack.c.l.b16 %v62
  %v1263 = vunpack.c.l.b16 %v63
  %v1264 = vunpack.c.l.b16 %v64
  %v1265 = vunpack.c.l.b16 %v65
  %v1266 = vunpack.c.l.b16 %v66
  %v1267 = vunpack.c.l.b16 %v67
  %v1268 = vunpack.c.l.b16 %v68
  %v1269 = vunpack.c.l.b16 %v69
  %v1270 = vunpack.c.l.b16 %v70
  %v1271 = vunpack.c.l.b16 %v71
  %v1272 = vunpack.c.l.b16 %v72
  %v1273 = vunpack.c.l.b16 %v73
  %v1274 = vunpack.c.l.b16 %v74
  %v1275 = vunpack.c.l.b16 %v75
  %v1276 = vunpack.c.l.b16 %v76
  %v1277 = vunpack.c.l.b16 %v77
  %v1278 = vunpack.c.l.b16 %v78
  %v1279 = vunpack.c.l.b16 %v79
  %v1280 = vunpack.c.l.b16 %v80
  %v1281 = vunpack.c.l.b16 %v81
  %v1282 = vunpack.c.l.b16 %v82
  %v1283 = vunpack.c.l.b16 %v83
  %v1284 = vunpack.c.l.b16 %v84
  %v1285 = vunpack.c.l.b16 %v85
  %v1286 = vunpack.c.l.b16 %v86
  %v1287 = vunpack.c.l.b16 %v87
  %v1288 = vunpack.c.l.b16 %v88
  %v1289 = vunpack.c.l.b16 %v89
  %v1290 = vunpack.c.l.b16 %v90
  %v1291 = vunpack.c.l.b16 %v91
  %v1292 = vunpack.c.l.b16 %v92
  %v1293 = vunpack.c.l.b16 %v93
  %v1294 = vunpack.c.l.b16 %v94
  %v1295 = vunpack.c.l.b16 %v95
  %v1296 = vunpack.c.l.b16 %v96
  %v1297 = vunpack.c.l.b16 %v97
  %v1298 = vunpack.c.l.b16 %v98
  %v1299 = vunpack.c.l.b16 %v99
  %v1300 = vunpack.c.l.b16 %v100
  %v1301 = vunpack.c.l.b16 %v101
  %v1302 = vunpack.c.l.b16 %v102
  %v1303 = vunpack.c.l.b16 %v103
  %v1304 = vunpack.c.l.b16 %v104
  %v1305 = vunpack.c.l.b16 %v105
  %v1306 = vunpack.c.l.b16 %v106
  %v1307 = vunpack.c.l.b16 %v107
  %v1308 = vunpack.c.l.b16 %v108
  %v1309 = vunpack.c.l.b16 %v109
  %v1310 = vunpack.c.l.b16 %v110
  %v1311 = vunpack.c.l.b16 %v111
  %v1312 = vunpack.c.l.b16 %v112
  %v1313 = vunpack.c.l.b16 %v113
  %v1314 = vunpack.c.l.b16 %v114
  %v1315 = vunpack.c.l.b16 %v115
  %v1316 = vunpack.c.l.b16 %v116
  %v1317 = vunpack.c.l.b16 %v117
  %v1318 = vunpack.c.l.b16 %v118
  %v1319 = vunpack.c.l.b16 %v119
  %v1320 = vunpack.c.l.b16 %v120
  %v1321 = vunpack.c.l.b16 %v121
  %v1322 = vunpack.c.l.b16 %v122
  %v1323 = vunpack.c.l.b16 %v123
  %v1324 = vunpack.c.l.b16 %v124
  %v1325 = vunpack.c.l.b16 %v125
  %v1326 = vunpack.c.l.b16 %v126
  %v1327 = vunpack.c.l.b16 %v127
  %v1328 = vunpack.c.l.b16 %v128
  %v1329 = vunpack.c.l.b16 %v129
  %v1330 = vunpack.c.l.b16 %v130
  %v1331 = vunpack.c.l.b16 %v131
  %v1332 = vunpack.c.l.b16 %v132
  %v1333 = vunpack.c.l.b16 %v133
  %v1334 = vunpack.c.l.b16 %v134
  %v1335 = vunpack.c.l.b16 %v135
  %v1336 = vunpack.c.l.b16 %v136
  %v1337 = vunpack.c.l.b16 %v137
  %v1338 = vunpack.c.l.b16 %v138
  %v1339 = vunpack.c.l.b16 %v139
  %v1340 = vunpack.c.l.b16 %v140
  %v1341 = vunpack.c.l.b16 %v141
  %v1342 = vunpack.c.l.b16 %v142
  %v1343 = vunpack.c.l.b16 %v143
  %v1344 = vunpack.c.l.b16 %v144
  %v1345 = vunpack.c.l.b16 %v145
  %v1346 = vunpack.c.l.b16 %v146
  %v1347 = vunpack.c.l.b16 %v147
  %v1348 = vunpack.c.l.b16 %v148
  %v1349 = vunpack.c.l.b16 %v149
  %v1350 = vunpack.c.l.b16 %v150
  %v1351 = vunpack.c.l.b16 %v151
  %v1352 = vunpack.c.l.b16 %v152
  %v1353 = vunpack.c.l.b16 %v153
  %v1354 = vunpack.c.l.b16 %v154
  %v1355 = vunpack.c.l.b16 %v155
  %v1356 = vunpack.c.l.b16 %v156
  %v1357 = vunpack.c.l.b16 %v157
  %v1358 = vunpack.c.l.b16 %v158
  %v1359 = vunpack.c.l.b16 %v159
  %v1360 = vunpack.c.l.b16 %v160
  %v1361 = vunpack.c.l.b16 %v161
  %v1362 = vunpack.c.l.b16 %v162
  %v1363 = vunpack.c.l.b16 %v163
  %v1364 = vunpack.c.l.b16 %v164
  %v1365 = vunpack.c.l.b16 %v165
  %v1366 = vunpack.c.l.b16 %v166
  %v1367 = vunpack.c.l.b16 %v167
  %v1368 = vunpack.c.l.b16 %v168
  %v1369 = vunpack.c.l.b16 %v169
  %v1370 = vunpack.c.l.b16 %v170
  %v1371 = vunpack.c.l.b16 %v171
  %v1372 = vunpack.c.l.b16 %v172
  %v1373 = vunpack.c.l.b16 %v173
  %v1374 = vunpack.c.l.b16 %v174
  %v1375 = vunpack.c.l.b16 %v175
  %v1376 = vunpack.c.l.b16 %v176
  %v1377 = vunpack.c.l.b16 %v177
  %v1378 = vunpack.c.l.b16 %v178
  %v1379 = vunpack.c.l.b16 %v179
  %v1380 = vunpack.c.l.b16 %v180
  %v1381 = vunpack.c.l.b16 %v181
  %v1382 = vunpack.c.l.b16 %v182
  %v1383 = vunpack.c.l.b16 %v183
  %v1384 = vunpack.c.l.b16 %v184
  %v1385 = vunpack.c.l.b16 %v185
  %v1386 = vunpack.c.l.b16 %v186
  %v1387 = vunpack.c.l.b16 %v187
  %v1388 = vunpack.c.l.b16 %v188
  %v1389 = vunpack.c.l.b16 %v189
  %v1390 = vunpack.c.l.b16 %v190
  %v1391 = vunpack.c.l.b16 %v191
  %v1392 = vunpack.c.l.b16 %v192
  %v1393 = vunpack.c.l.b16 %v193
  %v1394 = vunpack.c.l.b16 %v194
  %v1395 = vunpack.c.l.b16 %v195
  %v1396 = vunpack.c.l.b16 %v196
  %v1397 = vunpack.c.l.b16 %v197
  %v1398 = vunpack.c.l.b16 %v198
  %v1399 = vunpack.c.l.b16 %v199
  %v1400 = vunpack.c.l.b16 %v200
  %v1401 = vunpack.c.l.b16 %v201
  %v1402 = vunpack.c.l.b16 %v202
  %v1403 = vunpack.c.l.b16 %v203
  %v1404 = vunpack.c.l.b16 %v204
  %v1405 = vunpack.c.l.b16 %v205
  %v1406 = vunpack.c.l.b16 %v206
  %v1407 = vunpack.c.l.b16 %v207
  %v1408 = vunpack.c.l.b16 %v208
  %v1409 = vunpack.c.l.b16 %v209
  %v1410 = vunpack.c.l.b16 %v210
  %v1411 = vunpack.c.l.b16 %v211
  %v1412 = vunpack.c.l.b16 %v212
  %v1413 = vunpack.c.l.b16 %v213
  %v1414 = vunpack.c.l.b16 %v214
  %v1415 = vunpack.c.l.b16 %v215
  %v1416 = vunpack.c.l.b16 %v216
  %v1417 = vunpack.c.l.b16 %v217
  %v1418 = vunpack.c.l.b16 %v218
  %v1419 = vunpack.c.l.b16 %v219
  %v1420 = vunpack.c.l.b16 %v220
  %v1421 = vunpack.c.l.b16 %v221
  %v1422 = vunpack.c.l.b16 %v222
  %v1423 = vunpack.c.l.b16 %v223
  %v1424 = vunpack.c.l.b16 %v224
  %v1425 = vunpack.c.l.b16 %v225
  %v1426 = vunpack.c.l.b16 %v226
  %v1427 = vunpack.c.l.b16 %v227
  %v1428 = vunpack.c.l.b16 %v228
  %v1429 = vunpack.c.l.b16 %v229
  %v1430 = vunpack.c.l.b16 %v230
  %v1431 = vunpack.c.l.b16 %v231
  %v1432 = vunpack.c.l.b16 %v232
  %v1433 = vunpack.c.l.b16 %v233
  %v1434 = vunpack.c.l.b16 %v234
  %v1435 = vunpack.c.l.b16 %v235
  %v1436 = vunpack.c.l.b16 %v236
  %v1437 = vunpack.c.l.b16 %v237
  %v1438 = vunpack.c.l.b16 %v238
  %v1439 = vunpack.c.l.b16 %v239
  %v1440 = vunpack.c.l.b16 %v240
  %v1441 = vunpack.c.l.b16 %v241
  %v1442 = vunpack.c.l.b16 %v242
  %v1443 = vunpack.c.l.b16 %v243
  %v1444 = vunpack.c.l.b16 %v244
  %v1445 = vunpack.c.l.b16 %v245
  %v1446 = vunpack.c.l.b16 %v246
  %v1447 = vunpack.c.l.b16 %v247
  %v1448 = vunpack.c.l.b16 %v248
  %v1449 = vunpack.c.l.b16 %v249
  %v1450 = vunpack.c.l.b16 %v250
  %v1451 = vunpack.c.l.b16 %v251
  %v1452 = vunpack.c.l.b16 %v252
  %v1453 = vunpack.c.l.b16 %v253
  %v1454 = vunpack.c.l.b16 %v254
  %v1455 = vunpack.c.l.b16 %v255
  %v1456 = vunpack.c.l.b16 %v256
  %v1457 = vunpack.c.l.b16 %v257
  %v1458 = vunpack.c.l.b16 %v258
  %v1459 = vunpack.c.l.b16 %v259
  %v1460 = vunpack.c.l.b16 %v260
  %v1461 = vunpack.c.l.b16 %v261
  %v1462 = vunpack.c.l.b16 %v262
  %v1463 = vunpack.c.l.b16 %v263
  %v1464 = vunpack.c.l.b16 %v264
  %v1465 = vunpack.c.l.b16 %v265
  %v1466 = vunpack.c.l.b16 %v266
  %v1467 = vunpack.c.l.b16 %v267
  %v1468 = vunpack.c.l.b16 %v268
  %v1469 = vunpack.c.l.b16 %v269
  %v1470 = vunpack.c.l.b16 %v270
  %v1471 = vunpack.c.l.b16 %v271
  %v1472 = vunpack.c.l.b16 %v272
  %v1473 = vunpack.c.l.b16 %v273
  %v1474 = vunpack.c.l.b16 %v274
  %v1475 = vunpack.c.l.b16 %v275
  %v1476 = vunpack.c.l.b16 %v276
  %v1477 = vunpack.c.l.b16 %v277
  %v1478 = vunpack.c.l.b16 %v278
  %v1479 = vunpack.c.l.b16 %v279
  %v1480 = vunpack.c.l.b16 %v280
  %v1481 = vunpack.c.l.b16 %v281
  %v1482 = vunpack.c.l.b16 %v282
  %v1483 = vunpack.c.l.b16 %v283
  %v1484 = vunpack.c.l.b16 %v284
  %v1485 = vunpack.c.l.b16 %v285
  %v1486 = vunpack.c.l.b16 %v286
  %v1487 = vunpack.c.l.b16 %v287
  %v1488 = vunpack.c.l.b16 %v288
  %v1489 = vunpack.c.l.b16 %v289
  %v1490 = vunpack.c.l.b16 %v290
  %v1491 = vunpack.c.l.b16 %v291
  %v1492 = vunpack.c.l.b16 %v292
  %v1493 = vunpack.c.l.b16 %v293
  %v1494 = vunpack.c.l.b16 %v294
  %v1495 = vunpack.c.l.b16 %v295
  %v1496 = vunpack.c.l.b16 %v296
  %v1497 = vunpack.c.l.b16 %v297
  %v1498 = vunpack.c.l.b16 %v298
  %v1499 = vunpack.c.l.b16 %v299
  %v1500 = vunpack.c.l.b16 %v300
  %v1501 = vunpack.c.l.b16 %v301
  %v1502 = vunpack.c.l.b16 %v302
  %v1503 = vunpack.c.l.b16 %v303
  %v1504 = vunpack.c.l.b16 %v304
  %v1505 = vunpack.c.l.b16 %v305
  %v1506 = vunpack.c.l.b16 %v306
  %v1507 = vunpack.c.l.b16 %v307
  %v1508 = vunpack.c.l.b16 %v308
  %v1509 = vunpack.c.l.b16 %v309
  %v1510 = vunpack.c.l.b16 %v310
  %v1511 = vunpack.c.l.b16 %v311
  %v1512 = vunpack.c.l.b16 %v312
  %v1513 = vunpack.c.l.b16 %v313
  %v1514 = vunpack.c.l.b16 %v314
  %v1515 = vunpack.c.l.b16 %v315
  %v1516 = vunpack.c.l.b16 %v316
  %v1517 = vunpack.c.l.b16 %v317
  %v1518 = vunpack.c.l.b16 %v318
  %v1519 = vunpack.c.l.b16 %v319
  %v1520 = vunpack.c.l.b16 %v320
  %v1521 = vunpack.c.l.b16 %v321
  %v1522 = vunpack.c.l.b16 %v322
  %v1523 = vunpack.c.l.b16 %v323
  %v1524 = vunpack.c.l.b16 %v324
  %v1525 = vunpack.c.l.b16 %v325
  %v1526 = vunpack.c.l.b16 %v326
  %v1527 = vunpack.c.l.b16 %v327
  %v1528 = vunpack.c.l.b16 %v328
  %v1529 = vunpack.c.l.b16 %v329
  %v1530 = vunpack.c.l.b16 %v330
  %v1531 = vunpack.c.l.b16 %v331
  %v1532 = vunpack.c.l.b16 %v332
  %v1533 = vunpack.c.l.b16 %v333
  %v1534 = vunpack.c.l.b16 %v334
  %v1535 = vunpack.c.l.b16 %v335
  %v1536 = vunpack.c.l.b16 %v336
  %v1537 = vunpack.c.l.b16 %v337
  %v1538 = vunpack.c.l.b16 %v338
  %v1539 = vunpack.c.l.b16 %v339
  %v1540 = vunpack.c.l.b16 %v340
  %v1541 = vunpack.c.l.b16 %v341
  %v1542 = vunpack.c.l.b16 %v342
  %v1543 = vunpack.c.l.b16 %v343
  %v1544 = vunpack.c.l.b16 %v344
  %v1545 = vunpack.c.l.b16 %v345
  %v1546 = vunpack.c.l.b16 %v346
  %v1547 = vunpack.c.l.b16 %v347
  %v1548 = vunpack.c.l.b16 %v348
  %v1549 = vunpack.c.l.b16 %v349
  %v1550 = vunpack.c.l.b16 %v350
  %v1551 = vunpack.c.l.b16 %v351
  %v1552 = vunpack.c.l.b16 %v352
  %v1553 = vunpack.c.l.b16 %v353
  %v1554 = vunpack.c.l.b16 %v354
  %v1555 = vunpack.c.l.b16 %v355
  %v1556 = vunpack.c.l.b16 %v356
  %v1557 = vunpack.c.l.b16 %v357
  %v1558 = vunpack.c.l.b16 %v358
  %v1559 = vunpack.c.l.b16 %v359
  %v1560 = vunpack.c.l.b16 %v360
  %v1561 = vunpack.c.l.b16 %v361
  %v1562 = vunpack.c.l.b16 %v362
  %v1563 = vunpack.c.l.b16 %v363
  %v1564 = vunpack.c.l.b16 %v364
  %v1565 = vunpack.c.l.b16 %v365
  %v1566 = vunpack.c.l.b16 %v366
  %v1567 = vunpack.c.l.b16 %v367
  %v1568 = vunpack.c.l.b16 %v368
  %v1569 = vunpack.c.l.b16 %v369
  %v1570 = vunpack.c.l.b16 %v370
  %v1571 = vunpack.c.l.b16 %v371
  %v1572 = vunpack.c.l.b16 %v372
  %v1573 = vunpack.c.l.b16 %v373
  %v1574 = vunpack.c.l.b16 %v374
  %v1575 = vunpack.c.l.b16 %v375
  %v1576 = vunpack.c.l.b16 %v376
  %v1577 = vunpack.c.l.b16 %v377
  %v1578 = vunpack.c.l.b16 %v378
  %v1579 = vunpack.c.l.b16 %v379
  %v1580 = vunpack.c.l.b16 %v380
  %v1581 = vunpack.c.l.b16 %v381
  %v1582 = vunpack.c.l.b16 %v382
  %v1583 = vunpack.c.l.b16 %v383
  %v1584 = vunpack.c.l.b16 %v384
  %v1585 = vunpack.c.l.b16 %v385
  %v1586 = vunpack.c.l.b16 %v386
  %v1587 = vunpack.c.l.b16 %v387
  %v1588 = vunpack.c.l.b16 %v388
  %v1589 = vunpack.c.l.b16 %v389
  %v1590 = vunpack.c.l.b16 %v390
  %v1591 = vunpack.c.l.b16 %v391
  %v1592 = vunpack.c.l.b16 %v392
  %v1593 = vunpack.c.l.b16 %v393
  %v1594 = vunpack.c.l.b16 %v394
  %v1595 = vunpack.c.l.b16 %v395
  %v1596 = vunpack.c.l.b16 %v396
  %v1597 = vunpack.c.l.b16 %v397
  %v1598 = vunpack.c.l.b16 %v398
  %v1599 = vunpack.c.l.b16 %v399
  %v1600 = vunpack.c.l.b16 %v400
  %v1601 = vunpack.c.l.b16 %v401
  %v1602 = vunpack.c.l.b16 %v402
  %v1603 = vunpack.c.l.b16 %v403
  %v1604 = vunpack.c.l.b16 %v404
  %v1605 = vunpack.c.l.b16 %v405
  %v1606 = vunpack.c.l.b16 %v406
  %v1607 = vunpack.c.l.b16 %v407
  %v1608 = vunpack.c.l.b16 %v408
  %v1609 = vunpack.c.l.b16 %v409
  %v1610 = vunpack.c.l.b16 %v410
  %v1611 = vunpack.c.l.b16 %v411
  %v1612 = vunpack.c.l.b16 %v412
  %v1613 = vunpack.c.l.b16 %v413
  %v1614 = vunpack.c.l.b16 %v414
  %v1615 = vunpack.c.l.b16 %v415
  %v1616 = vunpack.c.l.b16 %v416
  %v1617 = vunpack.c.l.b16 %v417
  %v1618 = vunpack.c.l.b16 %v418
  %v1619 = vunpack.c.l.b16 %v419
  %v1620 = vunpack.c.l.b16 %v420
  %v1621 = vunpack.c.l.b16 %v421
  %v1622 = vunpack.c.l.b16 %v422
  %v1623 = vunpack.c.l.b16 %v423
  %v1624 = vunpack.c.l.b16 %v424
  %v1625 = vunpack.c.l.b16 %v425
  %v1626 = vunpack.c.l.b16 %v426
  %v1627 = vunpack.c.l.b16 %v427
  %v1628 = vunpack.c.l.b16 %v428
  %v1629 = vunpack.c.l.b16 %v429
  %v1630 = vunpack.c.l.b16 %v430
  %v1631 = vunpack.c.l.b16 %v431
  %v1632 = vunpack.c.l.b16 %v432
  %v1633 = vunpack.c.l.b16 %v433
  %v1634 = vunpack.c.l.b16 %v434
  %v1635 = vunpack.c.l.b16 %v435
  %v1636 = vunpack.c.l.b16 %v436
  %v1637 = vunpack.c.l.b16 %v437
  %v1638 = vunpack.c.l.b16 %v438
  %v1639 = vunpack.c.l.b16 %v439
  %v1640 = vunpack.c.l.b16 %v440
  %v1641 = vunpack.c.l.b16 %v441
  %v1642 = vunpack.c.l.b16 %v442
  %v1643 = vunpack.c.l.b16 %v443
  %v1644 = vunpack.c.l.b16 %v444
  %v1645 = vunpack.c.l.b16 %v445
  %v1646 = vunpack.c.l.b16 %v446
  %v1647 = vunpack.c.l.b16 %v447
  %v1648 = vunpack.c.l.b16 %v448
  %v1649 = vunpack.c.l.b16 %v449
  %v1650 = vunpack.c.l.b16 %v450
  %v1651 = vunpack.c.l.b16 %v451
  %v1652 = vunpack.c.l.b16 %v452
  %v1653 = vunpack.c.l.b16 %v453
  %v1654 = vunpack.c.l.b16 %v454
  %v1655 = vunpack.c.l.b16 %v455
  %v1656 = vunpack.c.l.b16 %v456
  %v1657 = vunpack.c.l.b16 %v457
  %v1658 = vunpack.c.l.b16 %v458
  %v1659 = vunpack.c.l.b16 %v459
  %v1660 = vunpack.c.l.b16 %v460
  %v1661 = vunpack.c.l.b16 %v461
  %v1662 = vunpack.c.l.b16 %v462
  %v1663 = vunpack.c.l.b16 %v463
  %v1664 = vunpack.c.l.b16 %v464
  %v1665 = vunpack.c.l.b16 %v465
  %v1666 = vunpack.c.l.b16 %v466
  %v1667 = vunpack.c.l.b16 %v467
  %v1668 = vunpack.c.l.b16 %v468
  %v1669 = vunpack.c.l.b16 %v469
  %v1670 = vunpack.c.l.b16 %v470
  %v1671 = vunpack.c.l.b16 %v471
  %v1672 = vunpack.c.l.b16 %v472
  %v1673 = vunpack.c.l.b16 %v473
  %v1674 = vunpack.c.l.b16 %v474
  %v1675 = vunpack.c.l.b16 %v475
  %v1676 = vunpack.c.l.b16 %v476
  %v1677 = vunpack.c.l.b16 %v477
  %v1678 = vunpack.c.l.b16 %v478
  %v1679 = vunpack.c.l.b16 %v479
  %v1680 = vunpack.c.l.b16 %v480
  %v1681 = vunpack.c.l.b16 %v481
  %v1682 = vunpack.c.l.b16 %v482
  %v1683 = vunpack.c.l.b16 %v483
  %v1684 = vunpack.c.l.b16 %v484
  %v1685 = vunpack.c.l.b16 %v485
  %v1686 = vunpack.c.l.b16 %v486
  %v1687 = vunpack.c.l.b16 %v487
  %v1688 = vunpack.c.l.b16 %v488
  %v1689 = vunpack.c.l.b16 %v489
  %v1690 = vunpack.c.l.b16 %v490
  %v1691 = vunpack.c.l.b16 %v491
  %v1692 = vunpack.c.l.b16 %v492
  %v1693 = vunpack.c.l.b16 %v493
  %v1694 = vunpack.c.l.b16 %v494
  %v1695 = vunpack.c.l.b16 %v495
  %v1696 = vunpack.c.l.b16 %v496
  %v1697 = vunpack.c.l.b16 %v497
  %v1698 = vunpack.c.l.b16 %v498
  %v1699 = vunpack.c.l.b16 %v499
  %v1700 = vunpack.c.l.b16 %v500
  %v1701 = vunpack.c.l.b16 %v501
  %v1702 = vunpack.c.l.b16 %v502
  %v1703 = vunpack.c.l.b16 %v503
  %v1704 = vunpack.c.l.b16 %v504
  %v1705 = vunpack.c.l.b16 %v505
  %v1706 = vunpack.c.l.b16 %v506
  %v1707 = vunpack.c.l.b16 %v507
  %v1708 = vunpack.c.l.b16 %v508
  %v1709 = vunpack.c.l.b16 %v509
  %v1710 = vunpack.c.l.b16 %v510
  %v1711 = vunpack.c.l.b16 %v511
  %v1712 = vunpack.c.l.b16 %v512
  %v1713 = vunpack.c.l.b16 %v513
  %v1714 = vunpack.c.l.b16 %v514
  %v1715 = vunpack.c.l.b16 %v515
  %v1716 = vunpack.c.l.b16 %v516
  %v1717 = vunpack.c.l.b16 %v517
  %v1718 = vunpack.c.l.b16 %v518
  %v1719 = vunpack.c.l.b16 %v519
  %v1720 = vunpack.c.l.b16 %v520
  %v1721 = vunpack.c.l.b16 %v521
  %v1722 = vunpack.c.l.b16 %v522
  %v1723 = vunpack.c.l.b16 %v523
  %v1724 = vunpack.c.l.b16 %v524
  %v1725 = vunpack.c.l.b16 %v525
  %v1726 = vunpack.c.l.b16 %v526
  %v1727 = vunpack.c.l.b16 %v527
  %v1728 = vunpack.c.l.b16 %v528
  %v1729 = vunpack.c.l.b16 %v529
  %v1730 = vunpack.c.l.b16 %v530
  %v1731 = vunpack.c.l.b16 %v531
  %v1732 = vunpack.c.l.b16 %v532
  %v1733 = vunpack.c.l.b16 %v533
  %v1734 = vunpack.c.l.b16 %v534
  %v1735 = vunpack.c.l.b16 %v535
  %v1736 = vunpack.c.l.b16 %v536
  %v1737 = vunpack.c.l.b16 %v537
  %v1738 = vunpack.c.l.b16 %v538
  %v1739 = vunpack.c.l.b16 %v539
  %v1740 = vunpack.c.l.b16 %v540
  %v1741 = vunpack.c.l.b16 %v541
  %v1742 = vunpack.c.l.b16 %v542
  %v1743 = vunpack.c.l.b16 %v543
  %v1744 = vpack.c.b16 %v1233, %v1232
  %v1745 = vpack.c.b16 %v1235, %v1234
  %v1746 = vpack.c.b16 %v1237, %v1236
  %v1747 = vpack.c.b16 %v1239, %v1238
  %v1748 = vpack.c.b16 %v1241, %v1240
  %v1749 = vpack.c.b16 %v1243, %v1242
  %v1750 = vpack.c.b16 %v1245, %v1244
  %v1751 = vpack.c.b16 %v1247, %v1246
  %v1752 = vpack.c.b16 %v1249, %v1248
  %v1753 = vpack.c.b16 %v1251, %v1250
  %v1754 = vpack.c.b16 %v1253, %v1252
  %v1755 = vpack.c.b16 %v1255, %v1254
  %v1756 = vpack.c.b16 %v1257, %v1256
  %v1757 = vpack.c.b16 %v1259, %v1258
  %v1758 = vpack.c.b16 %v1261, %v1260
  %v1759 = vpack.c.b16 %v1263, %v1262
  %v1760 = vpack.c.b16 %v1265, %v1264
  %v1761 = vpack.c.b16 %v1267, %v1266
  %v1762 = vpack.c.b16 %v1269, %v1268
  %v1763 = vpack.c.b16 %v1271, %v1270
  %v1764 = vpack.c.b16 %v1273, %v1272
  %v1765 = vpack.c.b16 %v1275, %v1274
  %v1766 = vpack.c.b16 %v1277, %v1276
  %v1767 = vpack.c.b16 %v1279, %v1278
  %v1768 = vpack.c.b16 %v1281, %v1280
  %v1769 = vpack.c.b16 %v1283, %v1282
  %v1770 = vpack.c.b16 %v1285, %v1284
  %v1771 = vpack.c.b16 %v1287, %v1286
  %v1772 = vpack.c.b16 %v1289, %v1288
  %v1773 = vpack.c.b16 %v1291, %v1290
  %v1774 = vpack.c.b16 %v1293, %v1292
  %v1775 = vpack.c.b16 %v1295, %v1294
  %v1776 = vpack.c.b16 %v1297, %v1296
  %v1777 = vpack.c.b16 %v1299, %v1298
  %v1778 = vpack.c.b16 %v1301, %v1300
  %v1779 = vpack.c.b16 %v1303, %v1302
  %v1780 = vpack.c.b16 %v1305, %v1304
  %v1781 = vpack.c.b16 %v1307, %v1306
  %v1782 = vpack.c.b16 %v1309, %v1308
  %v1783 = vpack.c.b16 %v1311, %v1310
  %v1784 = vpack.c.b16 %v1313, %v1312
  %v1785 = vpack.c.b16 %v1315, %v1314
  %v1786 = vpack.c.b16 %v1317, %v1316
  %v1787 = vpack.c.b16 %v1319, %v1318
  %v1788 = vpack.c.b16 %v1321, %v1320
  %v1789 = vpack.c.b16 %v1323, %v1322
  %v1790 = vpack.c.b16 %v1325, %v1324
  %v1791 = vpack.c.b16 %v1327, %v1326
  %v1792 = vpack.c.b16 %v1329, %v1328
  %v1793 = vpack.c.b16 %v1331, %v1330
  %v1794 = vpack.c.b16 %v1333, %v1332
  %v1795 = vpack.c.b16 %v1335, %v1334
  %v1796 = vpack.c.b16 %v1337, %v1336
  %v1797 = vpack.c.b16 %v1339, %v1338
  %v1798 = vpack.c.b16 %v1341, %v1340
  %v1799 = vpack.c.b16 %v1343, %v1342
  %v1800 = vpack.c.b16 %v1345, %v1344
  %v1801 = vpack.c.b16 %v1347, %v1346
  %v1802 = vpack.c.b16 %v1349, %v1348
  %v1803 = vpack.c.b16 %v1351, %v1350
  %v1804 = vpack.c.b16 %v1353, %v1352
  %v1805 = vpack.c.b16 %v1355, %v1354
  %v1806 = vpack.c.b16 %v1357, %v1356
  %v1807 = vpack.c.b16 %v1359, %v1358
  %v1808 = vpack.c.b16 %v1361, %v1360
  %v1809 = vpack.c.b16 %v1363, %v1362
  %v1810 = vpack.c.b16 %v1365, %v1364
  %v1811 = vpack.c.b16 %v1367, %v1366
  %v1812 = vpack.c.b16 %v1369, %v1368
  %v1813 = vpack.c.b16 %v1371, %v1370
  %v1814 = vpack.c.b16 %v1373, %v1372
  %v1815 = vpack.c.b16 %v1375, %v1374
  %v1816 = vpack.c.b16 %v1377, %v1376
  %v1817 = vpack.c.b16 %v1379, %v1378
  %v1818 = vpack.c.b16 %v1381, %v1380
  %v1819 = vpack.c.b16 %v1383, %v1382
  %v1820 = vpack.c.b16 %v1385, %v1384
  %v1821 = vpack.c.b16 %v1387, %v1386
  %v1822 = vpack.c.b16 %v1389, %v1388
  %v1823 = vpack.c.b16 %v1391, %v1390
  %v1824 = vpack.c.b16 %v1393, %v1392
  %v1825 = vpack.c.b16 %v1395, %v1394
  %v1826 = vpack.c.b16 %v1397, %v1396
  %v1827 = vpack.c.b16 %v1399, %v1398
  %v1828 = vpack.c.b16 %v1401, %v1400
  %v1829 = vpack.c.b16 %v1403, %v1402
  %v1830 = vpack.c.b16 %v1405, %v1404
  %v1831 = vpack.c.b16 %v1407, %v1406
  %v1832 = vpack.c.b16 %v1409, %v1408
  %v1833 = vpack.c.b16 %v1411, %v1410
  %v1834 = vpack.c.b16 %v1413, %v1412
  %v1835 = vpack.c.b16 %v1415, %v1414
  %v1836 = vpack.c.b16 %v1417, %v1416
  %v1837 = vpack.c.b16 %v1419, %v1418
  %v1838 = vpack.c.b16 %v1421, %v1420
  %v1839 = vpack.c.b16 %v1423, %v1422
  %v1840 = vpack.c.b16 %v1425, %v1424
  %v1841 = vpack.c.b16 %v1427, %v1426
  %v1842 = vpack.c.b16 %v1429, %v1428
  %v1843 = vpack.c.b16 %v1431, %v1430
  %v1844 = vpack.c.b16 %v1433, %v1432
  %v1845 = vpack.c.b16 %v1435, %v1434
  %v1846 = vpack.c.b16 %v1437, %v1436
  %v1847 = vpack.c.b16 %v1439, %v1438
  %v1848 = vpack.c.b16 %v1441, %v1440
  %v1849 = vpack.c.b16 %v1443, %v1442
  %v1850 = vpack.c.b16 %v1445, %v1444
  %v1851 = vpack.c.b16 %v1447, %v1446
  %v1852 = vpack.c.b16 %v1449, %v1448
  %v1853 = vpack.c.b16 %v1451, %v1450
  %v1854 = vpack.c.b16 %v1453, %v1452
  %v1855 = vpack.c.b16 %v1455, %v1454
  %v1856 = vpack.c.b16 %v1457, %v1456
  %v1857 = vpack.c.b16 %v1459, %v1458
  %v1858 = vpack.c.b16 %v1461, %v1460
  %v1859 = vpack.c.b16 %v1463, %v1462
  %v1860 = vpack.c.b16 %v1465, %v1464
  %v1861 = vpack.c.b16 %v1467, %v1466
  %v1862 = vpack.c.b16 %v1469, %v1468
  %v1863 = vpack.c.b16 %v1471, %v1470
  %v1864 = vpack.c.b16 %v1473, %v1472
  %v1865 = vpack.c.b16 %v1475, %v1474
  %v1866 = vpack.c.b16 %v1477, %v1476
  %v1867 = vpack.c.b16 %v1479, %v1478
  %v1868 = vpack.c.b16 %v1481, %v1480
  %v1869 = vpack.c.b16 %v1483, %v1482
  %v1870 = vpack.c.b16 %v1485, %v1484
  %v1871 = vpack.c.b16 %v1487, %v1486
  %v1872 = vpack.c.b16 %v1489, %v1488
  %v1873 = vpack.c.b16 %v1491, %v1490
  %v1874 = vpack.c.b16 %v1493, %v1492
  %v1875 = vpack.c.b16 %v1495, %v1494
  %v1876 = vpack.c.b16 %v1497, %v1496
  %v1877 = vpack.c.b16 %v1499, %v1498
  %v1878 = vpack.c.b16 %v1501, %v1500
  %v1879 = vpack.c.b16 %v1503, %v1502
  %v1880 = vpack.c.b16 %v1505, %v1504
  %v1881 = vpack.c.b16 %v1507, %v1506
  %v1882 = vpack.c.b16 %v1509, %v1508
  %v1883 = vpack.c.b16 %v1511, %v1510
  %v1884 = vpack.c.b16 %v1513, %v1512
  %v1885 = vpack.c.b16 %v1515, %v1514
  %v1886 = vpack.c.b16 %v1517, %v1516
  %v1887 = vpack.c.b16 %v1519, %v1518
  %v1888 = vpack.c.b16 %v1521, %v1520
  %v1889 = vpack.c.b16 %v1523, %v1522
  %v1890 = vpack.c.b16 %v1525, %v1524
  %v1891 = vpack.c.b16 %v1527, %v1526
  %v1892 = vpack.c.b16 %v1529, %v1528
  %v1893 = vpack.c.b16 %v1531, %v1530
  %v1894 = vpack.c.b16 %v1533, %v1532
  %v1895 = vpack.c.b16 %v1535, %v1534
  %v1896 = vpack.c.b16 %v1537, %v1536
  %v1897 = vpack.c.b16 %v1539, %v1538
  %v1898 = vpack.c.b16 %v1541, %v1540
  %v1899 = vpack.c.b16 %v1543, %v1542
  %v1900 = vpack.c.b16 %v1545, %v1544
  %v1901 = vpack.c.b16 %v1547, %v1546
  %v1902 = vpack.c.b16 %v1549, %v1548
  %v1903 = vpack.c.b16 %v1551, %v1550
  %v1904 = vpack.c.b16 %v1553, %v1552
  %v1905 = vpack.c.b16 %v1555, %v1554
  %v1906 = vpack.c.b16 %v1557, %v1556
  %v1907 = vpack.c.b16 %v1559, %v1558
  %v1908 = vpack.c.b16 %v1561, %v1560
  %v1909 = vpack.c.b16 %v1563, %v1562
  %v1910 = vpack.c.b16 %v1565, %v1564
  %v1911 = vpack.c.b16 %v1567, %v1566
  %v1912 = vpack.c.b16 %v1569, %v1568
  %v1913 = vpack.c.b16 %v1571, %v1570
  %v1914 = vpack.c.b16 %v1573, %v1572
  %v1915 = vpack.c.b16 %v1575, %v1574
  %v1916 = vpack.c.b16 %v1577, %v1576
  %v1917 = vpack.c.b16 %v1579, %v1578
  %v1918 = vpack.c.b16 %v1581, %v1580
  %v1919 = vpack.c.b16 %v1583, %v1582
  %v1920 = vpack.c.b16 %v1585, %v1584
  %v1921 = vpack.c.b16 %v1587, %v1586
  %v1922 = vpack.c.b16 %v1589, %v1588
  %v1923 = vpack.c.b16 %v1591, %v1590
  %v1924 = vpack.c.b16 %v1593, %v1592
  %v1925 = vpack.c.b16 %v1595, %v1594
  %v1926 = vpack.c.b16 %v1597, %v1596
  %v1927 = vpack.c.b16 %v1599, %v1598
  %v1928 = vpack.c.b16 %v1601, %v1600
  %v1929 = vpack.c.b16 %v1603, %v1602
  %v1930 = vpack.c.b16 %v1605, %v1604
  %v1931 = vpack.c.b16 %v1607, %v1606
  %v1932 = vpack.c.b16 %v1609, %v1608
  %v1933 = vpack.c.b16 %v1611, %v1610
  %v1934 = vpack.c.b16 %v1613, %v1612
  %v1935 = vpack.c.b16 %v1615, %v1614
  %v1936 = vpack.c.b16 %v1617, %v1616
  %v1937 = vpack.c.b16 %v1619, %v1618
  %v1938 = vpack.c.b16 %v1621, %v1620
  %v1939 = vpack.c.b16 %v1623, %v1622
  %v1940 = vpack.c.b16 %v1625, %v1624
  %v1941 = vpack.c.b16 %v1627, %v1626
  %v1942 = vpack.c.b16 %v1629, %v1628
  %v1943 = vpack.c.b16 %v1631, %v1630
  %v1944 = vpack.c.b16 %v1633, %v1632
  %v1945 = vpack.c.b16 %v1635, %v1634
  %v1946 = vpack.c.b16 %v1637, %v1636
  %v1947 = vpack.c.b16 %v1639, %v1638
  %v1948 = vpack.c.b16 %v1641, %v1640
  %v1949 = vpack.c.b16 %v1643, %v1642
  %v1950 = vpack.c.b16 %v1645, %v1644
  %v1951 = vpack.c.b16 %v1647, %v1646
  %v1952 = vpack.c.b16 %v1649, %v1648
  %v1953 = vpack.c.b16 %v1651, %v1650
  %v1954 = vpack.c.b16 %v1653, %v1652
  %v1955 = vpack.c.b16 %v1655, %v1654
  %v1956 = vpack.c.b16 %v1657, %v1656
  %v1957 = vpack.c.b16 %v1659, %v1658
  %v1958 = vpack.c.b16 %v1661, %v1660
  %v1959 = vpack.c.b16 %v1663, %v1662
  %v1960 = vpack.c.b16 %v1665, %v1664
  %v1961 = vpack.c.b16 %v1667, %v1666
  %v1962 = vpack.c.b16 %v1669, %v1668
  %v1963 = vpack.c.b16 %v1671, %v1670
  %v1964 = vpack.c.b16 %v1673, %v1672
  %v1965 = vpack.c.b16 %v1675, %v1674
  %v1966 = vpack.c.b16 %v1677, %v1676
  %v1967 = vpack.c.b16 %v1679, %v1678
  %v1968 = vpack.c.b16 %v1681, %v1680
  %v1969 = vpack.c.b16 %v1683, %v1682
  %v1970 = vpack.c.b16 %v1685, %v1684
  %v1971 = vpack.c.b16 %v1687, %v1686
  %v1972 = vpack.c.b16 %v1689, %v1688
  %v1973 = vpack.c.b16 %v1691, %v1690
  %v1974 = vpack.c.b16 %v1693, %v1692
  %v1975 = vpack.c.b16 %v1695, %v1694
  %v1976 = vpack.c.b16 %v1697, %v1696
  %v1977 = vpack.c.b16 %v1699, %v1698
  %v1978 = vpack.c.b16 %v1701, %v1700
  %v1979 = vpack.c.b16 %v1703, %v1702
  %v1980 = vpack.c.b16 %v1705, %v1704
  %v1981 = vpack.c.b16 %v1707, %v1706
  %v1982 = vpack.c.b16 %v1709, %v1708
  %v1983 = vpack.c.b16 %v1711, %v1710
  %v1984 = vpack.c.b16 %v1713, %v1712
  %v1985 = vpack.c.b16 %v1715, %v1714
  %v1986 = vpack.c.b16 %v1717, %v1716
  %v1987 = vpack.c.b16 %v1719, %v1718
  %v1988 = vpack.c.b16 %v1721, %v1720
  %v1989 = vpack.c.b16 %v1723, %v1722
  %v1990 = vpack.c.b16 %v1725, %v1724
  %v1991 = vpack.c.b16 %v1727, %v1726
  %v1992 = vpack.c.b16 %v1729, %v1728
  %v1993 = vpack.c.b16 %v1731, %v1730
  %v1994 = vpack.c.b16 %v1733, %v1732
  %v1995 = vpack.c.b16 %v1735, %v1734
  %v1996 = vpack.c.b16 %v1737, %v1736
  %v1997 = vpack.c.b16 %v1739, %v1738
  %v1998 = vpack.c.b16 %v1741, %v1740
  %v1999 = vpack.c.b16 %v1743, %v1742
  %2256 = vmatprep.subr.bf16.mxu0 0
  %2257 = vmatpush1.bf16.msra.mxu0 %v1744
  %2258 = vmatprep.subr.bf16.mxu0 0
  %2259 = vmatpush1.bf16.msra.mxu0 %v1745
  %2260 = vmatprep.subr.bf16.mxu0 0
  %2261 = vmatpush1.bf16.msra.mxu0 %v1746
  %2262 = vmatprep.subr.bf16.mxu0 0
  %2263 = vmatpush1.bf16.msra.mxu0 %v1747
  %2264 = vmatprep.subr.bf16.mxu0 0
  %2265 = vmatpush1.bf16.msra.mxu0 %v1748
  %2266 = vmatprep.subr.bf16.mxu0 0
  %2267 = vmatpush1.bf16.msra.mxu0 %v1749
  %2268 = vmatprep.subr.bf16.mxu0 0
  %2269 = vmatpush1.bf16.msra.mxu0 %v1750
  %2270 = vmatprep.subr.bf16.mxu0 0
  %2271 = vmatpush1.bf16.msra.mxu0 %v1751
  %2272 = vmatprep.subr.bf16.mxu0 0
  %2273 = vmatpush1.bf16.msra.mxu0 %v1752
  %2274 = vmatprep.subr.bf16.mxu0 0
  %2275 = vmatpush1.bf16.msra.mxu0 %v1753
  %2276 = vmatprep.subr.bf16.mxu0 0
  %2277 = vmatpush1.bf16.msra.mxu0 %v1754
  %2278 = vmatprep.subr.bf16.mxu0 0
  %2279 = vmatpush1.bf16.msra.mxu0 %v1755
  %2280 = vmatprep.subr.bf16.mxu0 0
  %2281 = vmatpush1.bf16.msra.mxu0 %v1756
  %2282 = vmatprep.subr.bf16.mxu0 0
  %2283 = vmatpush1.bf16.msra.mxu0 %v1757
  %2284 = vmatprep.subr.bf16.mxu0 0
  %2285 = vmatpush1.bf16.msra.mxu0 %v1758
  %2286 = vmatprep.subr.bf16.mxu0 0
  %2287 = vmatpush1.bf16.msra.mxu0 %v1759
  %2288 = vmatprep.mubr.bf16.mxu0 %v567
  %2289 = vmatmul.mubr.bf16.gmra.mrb[0].mxu0 %v559
  %v2290 = vpop.f32.mrb[0].mxu0
  %v2291 = vadd.f32 0.0, %v2290
  %v2292 = vpop.f32.mrb[0].mxu0
  %v2293 = vpop.f32.mrb[0].mxu0
  %v2294 = vpop.f32.mrb[0].mxu0
  %2295 = vdwg.mxu0
  %2296 = vmatprep.subr.bf16.mxu0 0
  %2297 = vmatpush1.bf16.msra.mxu0 %v1760
  %2298 = vmatprep.subr.bf16.mxu0 0
  %2299 = vmatpush1.bf16.msra.mxu0 %v1761
  %2300 = vmatprep.subr.bf16.mxu0 0
  %2301 = vmatpush1.bf16.msra.mxu0 %v1762
  %2302 = vmatprep.subr.bf16.mxu0 0
  %2303 = vmatpush1.bf16.msra.mxu0 %v1763
  %2304 = vmatprep.subr.bf16.mxu0 0
  %2305 = vmatpush1.bf16.msra.mxu0 %v1764
  %2306 = vmatprep.subr.bf16.mxu0 0
  %2307 = vmatpush1.bf16.msra.mxu0 %v1765
  %2308 = vmatprep.subr.bf16.mxu0 0
  %2309 = vmatpush1.bf16.msra.mxu0 %v1766
  %2310 = vmatprep.subr.bf16.mxu0 0
  %2311 = vmatpush1.bf16.msra.mxu0 %v1767
  %2312 = vmatprep.subr.bf16.mxu0 0
  %2313 = vmatpush1.bf16.msra.mxu0 %v1768
  %2314 = vmatprep.subr.bf16.mxu0 0
  %2315 = vmatpush1.bf16.msra.mxu0 %v1769
  %2316 = vmatprep.subr.bf16.mxu0 0
  %2317 = vmatpush1.bf16.msra.mxu0 %v1770
  %2318 = vmatprep.subr.bf16.mxu0 0
  %2319 = vmatpush1.bf16.msra.mxu0 %v1771
  %2320 = vmatprep.subr.bf16.mxu0 0
  %2321 = vmatpush1.bf16.msra.mxu0 %v1772
  %2322 = vmatprep.subr.bf16.mxu0 0
  %2323 = vmatpush1.bf16.msra.mxu0 %v1773
  %2324 = vmatprep.subr.bf16.mxu0 0
  %2325 = vmatpush1.bf16.msra.mxu0 %v1774
  %2326 = vmatprep.subr.bf16.mxu0 0
  %2327 = vmatpush1.bf16.msra.mxu0 %v1775
  %2328 = vmatprep.mubr.bf16.mxu0 %v568
  %2329 = vmatmul.mubr.bf16.gmra.mrb[0].mxu0 %v566
  %v2330 = vpop.f32.mrb[0].mxu0
  %v2331 = vadd.f32 %v2291, %v2330
  %v2332 = vpop.f32.mrb[0].mxu0
  %v2333 = vpop.f32.mrb[0].mxu0
  %v2334 = vpop.f32.mrb[0].mxu0
  %2335 = vdwg.mxu0
  %2336 = vmatprep.subr.bf16.mxu0 0
  %2337 = vmatpush1.bf16.msra.mxu0 %v1776
  %2338 = vmatprep.subr.bf16.mxu0 0
  %2339 = vmatpush1.bf16.msra.mxu0 %v1777
  %2340 = vmatprep.subr.bf16.mxu0 0
  %2341 = vmatpush1.bf16.msra.mxu0 %v1778
  %2342 = vmatprep.subr.bf16.mxu0 0
  %2343 = vmatpush1.bf16.msra.mxu0 %v1779
  %2344 = vmatprep.subr.bf16.mxu0 0
  %2345 = vmatpush1.bf16.msra.mxu0 %v1780
  %2346 = vmatprep.subr.bf16.mxu0 0
  %2347 = vmatpush1.bf16.msra.mxu0 %v1781
  %2348 = vmatprep.subr.bf16.mxu0 0
  %2349 = vmatpush1.bf16.msra.mxu0 %v1782
  %2350 = vmatprep.subr.bf16.mxu0 0
  %2351 = vmatpush1.bf16.msra.mxu0 %v1783
  %2352 = vmatprep.subr.bf16.mxu0 0
  %2353 = vmatpush1.bf16.msra.mxu0 %v1784
  %2354 = vmatprep.subr.bf16.mxu0 0
  %2355 = vmatpush1.bf16.msra.mxu0 %v1785
  %2356 = vmatprep.subr.bf16.mxu0 0
  %2357 = vmatpush1.bf16.msra.mxu0 %v1786
  %2358 = vmatprep.subr.bf16.mxu0 0
  %2359 = vmatpush1.bf16.msra.mxu0 %v1787
  %2360 = vmatprep.subr.bf16.mxu0 0
  %2361 = vmatpush1.bf16.msra.mxu0 %v1788
  %2362 = vmatprep.subr.bf16.mxu0 0
  %2363 = vmatpush1.bf16.msra.mxu0 %v1789
  %2364 = vmatprep.subr.bf16.mxu0 0
  %2365 = vmatpush1.bf16.msra.mxu0 %v1790
  %2366 = vmatprep.subr.bf16.mxu0 0
  %2367 = vmatpush1.bf16.msra.mxu0 %v1791
  %2368 = vmatprep.mubr.bf16.mxu0 %v584
  %2369 = vmatmul.mubr.bf16.gmra.mrb[0].mxu0 %v576
  %v2370 = vpop.f32.mrb[0].mxu0
  %v2371 = vadd.f32 %v2331, %v2370
  %v2372 = vpop.f32.mrb[0].mxu0
  %v2373 = vpop.f32.mrb[0].mxu0
  %v2374 = vpop.f32.mrb[0].mxu0
  %2375 = vdwg.mxu0
  %2376 = vmatprep.subr.bf16.mxu0 0
  %2377 = vmatpush1.bf16.msra.mxu0 %v1792
  %2378 = vmatprep.subr.bf16.mxu0 0
  %2379 = vmatpush1.bf16.msra.mxu0 %v1793
  %2380 = vmatprep.subr.bf16.mxu0 0
  %2381 = vmatpush1.bf16.msra.mxu0 %v1794
  %2382 = vmatprep.subr.bf16.mxu0 0
  %2383 = vmatpush1.bf16.msra.mxu0 %v1795
  %2384 = vmatprep.subr.bf16.mxu0 0
  %2385 = vmatpush1.bf16.msra.mxu0 %v1796
  %2386 = vmatprep.subr.bf16.mxu0 0
  %2387 = vmatpush1.bf16.msra.mxu0 %v1797
  %2388 = vmatprep.subr.bf16.mxu0 0
  %2389 = vmatpush1.bf16.msra.mxu0 %v1798
  %2390 = vmatprep.subr.bf16.mxu0 0
  %2391 = vmatpush1.bf16.msra.mxu0 %v1799
  %2392 = vmatprep.subr.bf16.mxu0 0
  %2393 = vmatpush1.bf16.msra.mxu0 %v1800
  %2394 = vmatprep.subr.bf16.mxu0 0
  %2395 = vmatpush1.bf16.msra.mxu0 %v1801
  %2396 = vmatprep.subr.bf16.mxu0 0
  %2397 = vmatpush1.bf16.msra.mxu0 %v1802
  %2398 = vmatprep.subr.bf16.mxu0 0
  %2399 = vmatpush1.bf16.msra.mxu0 %v1803
  %2400 = vmatprep.subr.bf16.mxu0 0
  %2401 = vmatpush1.bf16.msra.mxu0 %v1804
  %2402 = vmatprep.subr.bf16.mxu0 0
  %2403 = vmatpush1.bf16.msra.mxu0 %v1805
  %2404 = vmatprep.subr.bf16.mxu0 0
  %2405 = vmatpush1.bf16.msra.mxu0 %v1806
  %2406 = vmatprep.subr.bf16.mxu0 0
  %2407 = vmatpush1.bf16.msra.mxu0 %v1807
  %2408 = vmatprep.mubr.bf16.mxu0 %v585
  %2409 = vmatmul.mubr.bf16.gmra.mrb[0].mxu0 %v583
  %v2410 = vpop.f32.mrb[0].mxu0
  %v2411 = vadd.f32 %v2371, %v2410
  %v2412 = vpop.f32.mrb[0].mxu0
  %v2413 = vpop.f32.mrb[0].mxu0
  %v2414 = vpop.f32.mrb[0].mxu0
  %2415 = vdwg.mxu0
  %2416 = vmatprep.subr.bf16.mxu0 0
  %2417 = vmatpush1.bf16.msra.mxu0 %v1808
  %2418 = vmatprep.subr.bf16.mxu0 0
  %2419 = vmatpush1.bf16.msra.mxu0 %v1809
  %2420 = vmatprep.subr.bf16.mxu0 0
  %2421 = vmatpush1.bf16.msra.mxu0 %v1810
  %2422 = vmatprep.subr.bf16.mxu0 0
  %2423 = vmatpush1.bf16.msra.mxu0 %v1811
  %2424 = vmatprep.subr.bf16.mxu0 0
  %2425 = vmatpush1.bf16.msra.mxu0 %v1812
  %2426 = vmatprep.subr.bf16.mxu0 0
  %2427 = vmatpush1.bf16.msra.mxu0 %v1813
  %2428 = vmatprep.subr.bf16.mxu0 0
  %2429 = vmatpush1.bf16.msra.mxu0 %v1814
  %2430 = vmatprep.subr.bf16.mxu0 0
  %2431 = vmatpush1.bf16.msra.mxu0 %v1815
  %2432 = vmatprep.subr.bf16.mxu0 0
  %2433 = vmatpush1.bf16.msra.mxu0 %v1816
  %2434 = vmatprep.subr.bf16.mxu0 0
  %2435 = vmatpush1.bf16.msra.mxu0 %v1817
  %2436 = vmatprep.subr.bf16.mxu0 0
  %2437 = vmatpush1.bf16.msra.mxu0 %v1818
  %2438 = vmatprep.subr.bf16.mxu0 0
  %2439 = vmatpush1.bf16.msra.mxu0 %v1819
  %2440 = vmatprep.subr.bf16.mxu0 0
  %2441 = vmatpush1.bf16.msra.mxu0 %v1820
  %2442 = vmatprep.subr.bf16.mxu0 0
  %2443 = vmatpush1.bf16.msra.mxu0 %v1821
  %2444 = vmatprep.subr.bf16.mxu0 0
  %2445 = vmatpush1.bf16.msra.mxu0 %v1822
  %2446 = vmatprep.subr.bf16.mxu0 0
  %2447 = vmatpush1.bf16.msra.mxu0 %v1823
  %2448 = vmatprep.mubr.bf16.mxu0 %v601
  %2449 = vmatmul.mubr.bf16.gmra.mrb[0].mxu0 %v593
  %v2450 = vpop.f32.mrb[0].mxu0
  %v2451 = vadd.f32 %v2411, %v2450
  %v2452 = vpop.f32.mrb[0].mxu0
  %v2453 = vpop.f32.mrb[0].mxu0
  %v2454 = vpop.f32.mrb[0].mxu0
  %2455 = vdwg.mxu0
  %2456 = vmatprep.subr.bf16.mxu0 0
  %2457 = vmatpush1.bf16.msra.mxu0 %v1824
  %2458 = vmatprep.subr.bf16.mxu0 0
  %2459 = vmatpush1.bf16.msra.mxu0 %v1825
  %2460 = vmatprep.subr.bf16.mxu0 0
  %2461 = vmatpush1.bf16.msra.mxu0 %v1826
  %2462 = vmatprep.subr.bf16.mxu0 0
  %2463 = vmatpush1.bf16.msra.mxu0 %v1827
  %2464 = vmatprep.subr.bf16.mxu0 0
  %2465 = vmatpush1.bf16.msra.mxu0 %v1828
  %2466 = vmatprep.subr.bf16.mxu0 0
  %2467 = vmatpush1.bf16.msra.mxu0 %v1829
  %2468 = vmatprep.subr.bf16.mxu0 0
  %2469 = vmatpush1.bf16.msra.mxu0 %v1830
  %2470 = vmatprep.subr.bf16.mxu0 0
  %2471 = vmatpush1.bf16.msra.mxu0 %v1831
  %2472 = vmatprep.subr.bf16.mxu0 0
  %2473 = vmatpush1.bf16.msra.mxu0 %v1832
  %2474 = vmatprep.subr.bf16.mxu0 0
  %2475 = vmatpush1.bf16.msra.mxu0 %v1833
  %2476 = vmatprep.subr.bf16.mxu0 0
  %2477 = vmatpush1.bf16.msra.mxu0 %v1834
  %2478 = vmatprep.subr.bf16.mxu0 0
  %2479 = vmatpush1.bf16.msra.mxu0 %v1835
  %2480 = vmatprep.subr.bf16.mxu0 0
  %2481 = vmatpush1.bf16.msra.mxu0 %v1836
  %2482 = vmatprep.subr.bf16.mxu0 0
  %2483 = vmatpush1.bf16.msra.mxu0 %v1837
  %2484 = vmatprep.subr.bf16.mxu0 0
  %2485 = vmatpush1.bf16.msra.mxu0 %v1838
  %2486 = vmatprep.subr.bf16.mxu0 0
  %2487 = vmatpush1.bf16.msra.mxu0 %v1839
  %2488 = vmatprep.mubr.bf16.mxu0 %v602
  %2489 = vmatmul.mubr.bf16.gmra.mrb[0].mxu0 %v600
  %v2490 = vpop.f32.mrb[0].mxu0
  %v2491 = vadd.f32 %v2451, %v2490
  %v2492 = vpop.f32.mrb[0].mxu0
  %v2493 = vpop.f32.mrb[0].mxu0
  %v2494 = vpop.f32.mrb[0].mxu0
  %2495 = vdwg.mxu0
  %2496 = vmatprep.subr.bf16.mxu0 0
  %2497 = vmatpush1.bf16.msra.mxu0 %v1840
  %2498 = vmatprep.subr.bf16.mxu0 0
  %2499 = vmatpush1.bf16.msra.mxu0 %v1841
  %2500 = vmatprep.subr.bf16.mxu0 0
  %2501 = vmatpush1.bf16.msra.mxu0 %v1842
  %2502 = vmatprep.subr.bf16.mxu0 0
  %2503 = vmatpush1.bf16.msra.mxu0 %v1843
  %2504 = vmatprep.subr.bf16.mxu0 0
  %2505 = vmatpush1.bf16.msra.mxu0 %v1844
  %2506 = vmatprep.subr.bf16.mxu0 0
  %2507 = vmatpush1.bf16.msra.mxu0 %v1845
  %2508 = vmatprep.subr.bf16.mxu0 0
  %2509 = vmatpush1.bf16.msra.mxu0 %v1846
  %2510 = vmatprep.subr.bf16.mxu0 0
  %2511 = vmatpush1.bf16.msra.mxu0 %v1847
  %2512 = vmatprep.subr.bf16.mxu0 0
  %2513 = vmatpush1.bf16.msra.mxu0 %v1848
  %2514 = vmatprep.subr.bf16.mxu0 0
  %2515 = vmatpush1.bf16.msra.mxu0 %v1849
  %2516 = vmatprep.subr.bf16.mxu0 0
  %2517 = vmatpush1.bf16.msra.mxu0 %v1850
  %2518 = vmatprep.subr.bf16.mxu0 0
  %2519 = vmatpush1.bf16.msra.mxu0 %v1851
  %2520 = vmatprep.subr.bf16.mxu0 0
  %2521 = vmatpush1.bf16.msra.mxu0 %v1852
  %2522 = vmatprep.subr.bf16.mxu0 0
  %2523 = vmatpush1.bf16.msra.mxu0 %v1853
  %2524 = vmatprep.subr.bf16.mxu0 0
  %2525 = vmatpush1.bf16.msra.mxu0 %v1854
  %2526 = vmatprep.subr.bf16.mxu0 0
  %2527 = vmatpush1.bf16.msra.mxu0 %v1855
  %2528 = vmatprep.mubr.bf16.mxu0 %v618
  %2529 = vmatmul.mubr.bf16.gmra.mrb[0].mxu0 %v610
  %v2530 = vpop.f32.mrb[0].mxu0
  %v2531 = vadd.f32 %v2491, %v2530
  %v2532 = vpop.f32.mrb[0].mxu0
  %v2533 = vpop.f32.mrb[0].mxu0
  %v2534 = vpop.f32.mrb[0].mxu0
  %2535 = vdwg.mxu0
  %2536 = vmatprep.subr.bf16.mxu0 0
  %2537 = vmatpush1.bf16.msra.mxu0 %v1856
  %2538 = vmatprep.subr.bf16.mxu0 0
  %2539 = vmatpush1.bf16.msra.mxu0 %v1857
  %2540 = vmatprep.subr.bf16.mxu0 0
  %2541 = vmatpush1.bf16.msra.mxu0 %v1858
  %2542 = vmatprep.subr.bf16.mxu0 0
  %2543 = vmatpush1.bf16.msra.mxu0 %v1859
  %2544 = vmatprep.subr.bf16.mxu0 0
  %2545 = vmatpush1.bf16.msra.mxu0 %v1860
  %2546 = vmatprep.subr.bf16.mxu0 0
  %2547 = vmatpush1.bf16.msra.mxu0 %v1861
  %2548 = vmatprep.subr.bf16.mxu0 0
  %2549 = vmatpush1.bf16.msra.mxu0 %v1862
  %2550 = vmatprep.subr.bf16.mxu0 0
  %2551 = vmatpush1.bf16.msra.mxu0 %v1863
  %2552 = vmatprep.subr.bf16.mxu0 0
  %2553 = vmatpush1.bf16.msra.mxu0 %v1864
  %2554 = vmatprep.subr.bf16.mxu0 0
  %2555 = vmatpush1.bf16.msra.mxu0 %v1865
  %2556 = vmatprep.subr.bf16.mxu0 0
  %2557 = vmatpush1.bf16.msra.mxu0 %v1866
  %2558 = vmatprep.subr.bf16.mxu0 0
  %2559 = vmatpush1.bf16.msra.mxu0 %v1867
  %2560 = vmatprep.subr.bf16.mxu0 0
  %2561 = vmatpush1.bf16.msra.mxu0 %v1868
  %2562 = vmatprep.subr.bf16.mxu0 0
  %2563 = vmatpush1.bf16.msra.mxu0 %v1869
  %2564 = vmatprep.subr.bf16.mxu0 0
  %2565 = vmatpush1.bf16.msra.mxu0 %v1870
  %2566 = vmatprep.subr.bf16.mxu0 0
  %2567 = vmatpush1.bf16.msra.mxu0 %v1871
  %2568 = vmatprep.mubr.bf16.mxu0 %v619
  %2569 = vmatmul.mubr.bf16.gmra.mrb[0].mxu0 %v617
  %v2570 = vpop.f32.mrb[0].mxu0
  %v2571 = vadd.f32 %v2531, %v2570
  %v2572 = vpop.f32.mrb[0].mxu0
  %v2573 = vpop.f32.mrb[0].mxu0
  %v2574 = vpop.f32.mrb[0].mxu0
  %2575 = vdwg.mxu0
  %2576 = vmatprep.subr.bf16.mxu0 0
  %2577 = vmatpush1.bf16.msra.mxu0 %v1872
  %2578 = vmatprep.subr.bf16.mxu0 0
  %2579 = vmatpush1.bf16.msra.mxu0 %v1873
  %2580 = vmatprep.subr.bf16.mxu0 0
  %2581 = vmatpush1.bf16.msra.mxu0 %v1874
  %2582 = vmatprep.subr.bf16.mxu0 0
  %2583 = vmatpush1.bf16.msra.mxu0 %v1875
  %2584 = vmatprep.subr.bf16.mxu0 0
  %2585 = vmatpush1.bf16.msra.mxu0 %v1876
  %2586 = vmatprep.subr.bf16.mxu0 0
  %2587 = vmatpush1.bf16.msra.mxu0 %v1877
  %2588 = vmatprep.subr.bf16.mxu0 0
  %2589 = vmatpush1.bf16.msra.mxu0 %v1878
  %2590 = vmatprep.subr.bf16.mxu0 0
  %2591 = vmatpush1.bf16.msra.mxu0 %v1879
  %2592 = vmatprep.subr.bf16.mxu0 0
  %2593 = vmatpush1.bf16.msra.mxu0 %v1880
  %2594 = vmatprep.subr.bf16.mxu0 0
  %2595 = vmatpush1.bf16.msra.mxu0 %v1881
  %2596 = vmatprep.subr.bf16.mxu0 0
  %2597 = vmatpush1.bf16.msra.mxu0 %v1882
  %2598 = vmatprep.subr.bf16.mxu0 0
  %2599 = vmatpush1.bf16.msra.mxu0 %v1883
  %2600 = vmatprep.subr.bf16.mxu0 0
  %2601 = vmatpush1.bf16.msra.mxu0 %v1884
  %2602 = vmatprep.subr.bf16.mxu0 0
  %2603 = vmatpush1.bf16.msra.mxu0 %v1885
  %2604 = vmatprep.subr.bf16.mxu0 0
  %2605 = vmatpush1.bf16.msra.mxu0 %v1886
  %2606 = vmatprep.subr.bf16.mxu0 0
  %2607 = vmatpush1.bf16.msra.mxu0 %v1887
  %2608 = vmatprep.mubr.bf16.mxu0 %v635
  %2609 = vmatmul.mubr.bf16.gmra.mrb[0].mxu0 %v627
  %v2610 = vpop.f32.mrb[0].mxu0
  %v2611 = vadd.f32 %v2571, %v2610
  %v2612 = vpop.f32.mrb[0].mxu0
  %v2613 = vpop.f32.mrb[0].mxu0
  %v2614 = vpop.f32.mrb[0].mxu0
  %2615 = vdwg.mxu0
  %2616 = vmatprep.subr.bf16.mxu0 0
  %2617 = vmatpush1.bf16.msra.mxu0 %v1888
  %2618 = vmatprep.subr.bf16.mxu0 0
  %2619 = vmatpush1.bf16.msra.mxu0 %v1889
  %2620 = vmatprep.subr.bf16.mxu0 0
  %2621 = vmatpush1.bf16.msra.mxu0 %v1890
  %2622 = vmatprep.subr.bf16.mxu0 0
  %2623 = vmatpush1.bf16.msra.mxu0 %v1891
  %2624 = vmatprep.subr.bf16.mxu0 0
  %2625 = vmatpush1.bf16.msra.mxu0 %v1892
  %2626 = vmatprep.subr.bf16.mxu0 0
  %2627 = vmatpush1.bf16.msra.mxu0 %v1893
  %2628 = vmatprep.subr.bf16.mxu0 0
  %2629 = vmatpush1.bf16.msra.mxu0 %v1894
  %2630 = vmatprep.subr.bf16.mxu0 0
  %2631 = vmatpush1.bf16.msra.mxu0 %v1895
  %2632 = vmatprep.subr.bf16.mxu0 0
  %2633 = vmatpush1.bf16.msra.mxu0 %v1896
  %2634 = vmatprep.subr.bf16.mxu0 0
  %2635 = vmatpush1.bf16.msra.mxu0 %v1897
  %2636 = vmatprep.subr.bf16.mxu0 0
  %2637 = vmatpush1.bf16.msra.mxu0 %v1898
  %2638 = vmatprep.subr.bf16.mxu0 0
  %2639 = vmatpush1.bf16.msra.mxu0 %v1899
  %2640 = vmatprep.subr.bf16.mxu0 0
  %2641 = vmatpush1.bf16.msra.mxu0 %v1900
  %2642 = vmatprep.subr.bf16.mxu0 0
  %2643 = vmatpush1.bf16.msra.mxu0 %v1901
  %2644 = vmatprep.subr.bf16.mxu0 0
  %2645 = vmatpush1.bf16.msra.mxu0 %v1902
  %2646 = vmatprep.subr.bf16.mxu0 0
  %2647 = vmatpush1.bf16.msra.mxu0 %v1903
  %2648 = vmatprep.mubr.bf16.mxu0 %v636
  %2649 = vmatmul.mubr.bf16.gmra.mrb[0].mxu0 %v634
  %v2650 = vpop.f32.mrb[0].mxu0
  %v2651 = vadd.f32 %v2611, %v2650
  %v2652 = vpop.f32.mrb[0].mxu0
  %v2653 = vpop.f32.mrb[0].mxu0
  %v2654 = vpop.f32.mrb[0].mxu0
  %2655 = vdwg.mxu0
  %2656 = vmatprep.subr.bf16.mxu0 0
  %2657 = vmatpush1.bf16.msra.mxu0 %v1904
  %2658 = vmatprep.subr.bf16.mxu0 0
  %2659 = vmatpush1.bf16.msra.mxu0 %v1905
  %2660 = vmatprep.subr.bf16.mxu0 0
  %2661 = vmatpush1.bf16.msra.mxu0 %v1906
  %2662 = vmatprep.subr.bf16.mxu0 0
  %2663 = vmatpush1.bf16.msra.mxu0 %v1907
  %2664 = vmatprep.subr.bf16.mxu0 0
  %2665 = vmatpush1.bf16.msra.mxu0 %v1908
  %2666 = vmatprep.subr.bf16.mxu0 0
  %2667 = vmatpush1.bf16.msra.mxu0 %v1909
  %2668 = vmatprep.subr.bf16.mxu0 0
  %2669 = vmatpush1.bf16.msra.mxu0 %v1910
  %2670 = vmatprep.subr.bf16.mxu0 0
  %2671 = vmatpush1.bf16.msra.mxu0 %v1911
  %2672 = vmatprep.subr.bf16.mxu0 0
  %2673 = vmatpush1.bf16.msra.mxu0 %v1912
  %2674 = vmatprep.subr.bf16.mxu0 0
  %2675 = vmatpush1.bf16.msra.mxu0 %v1913
  %2676 = vmatprep.subr.bf16.mxu0 0
  %2677 = vmatpush1.bf16.msra.mxu0 %v1914
  %2678 = vmatprep.subr.bf16.mxu0 0
  %2679 = vmatpush1.bf16.msra.mxu0 %v1915
  %2680 = vmatprep.subr.bf16.mxu0 0
  %2681 = vmatpush1.bf16.msra.mxu0 %v1916
  %2682 = vmatprep.subr.bf16.mxu0 0
  %2683 = vmatpush1.bf16.msra.mxu0 %v1917
  %2684 = vmatprep.subr.bf16.mxu0 0
  %2685 = vmatpush1.bf16.msra.mxu0 %v1918
  %2686 = vmatprep.subr.bf16.mxu0 0
  %2687 = vmatpush1.bf16.msra.mxu0 %v1919
  %2688 = vmatprep.mubr.bf16.mxu0 %v652
  %2689 = vmatmul.mubr.bf16.gmra.mrb[0].mxu0 %v644
  %v2690 = vpop.f32.mrb[0].mxu0
  %v2691 = vadd.f32 %v2651, %v2690
  %v2692 = vpop.f32.mrb[0].mxu0
  %v2693 = vpop.f32.mrb[0].mxu0
  %v2694 = vpop.f32.mrb[0].mxu0
  %2695 = vdwg.mxu0
  %2696 = vmatprep.subr.bf16.mxu0 0
  %2697 = vmatpush1.bf16.msra.mxu0 %v1920
  %2698 = vmatprep.subr.bf16.mxu0 0
  %2699 = vmatpush1.bf16.msra.mxu0 %v1921
  %2700 = vmatprep.subr.bf16.mxu0 0
  %2701 = vmatpush1.bf16.msra.mxu0 %v1922
  %2702 = vmatprep.subr.bf16.mxu0 0
  %2703 = vmatpush1.bf16.msra.mxu0 %v1923
  %2704 = vmatprep.subr.bf16.mxu0 0
  %2705 = vmatpush1.bf16.msra.mxu0 %v1924
  %2706 = vmatprep.subr.bf16.mxu0 0
  %2707 = vmatpush1.bf16.msra.mxu0 %v1925
  %2708 = vmatprep.subr.bf16.mxu0 0
  %2709 = vmatpush1.bf16.msra.mxu0 %v1926
  %2710 = vmatprep.subr.bf16.mxu0 0
  %2711 = vmatpush1.bf16.msra.mxu0 %v1927
  %2712 = vmatprep.subr.bf16.mxu0 0
  %2713 = vmatpush1.bf16.msra.mxu0 %v1928
  %2714 = vmatprep.subr.bf16.mxu0 0
  %2715 = vmatpush1.bf16.msra.mxu0 %v1929
  %2716 = vmatprep.subr.bf16.mxu0 0
  %2717 = vmatpush1.bf16.msra.mxu0 %v1930
  %2718 = vmatprep.subr.bf16.mxu0 0
  %2719 = vmatpush1.bf16.msra.mxu0 %v1931
  %2720 = vmatprep.subr.bf16.mxu0 0
  %2721 = vmatpush1.bf16.msra.mxu0 %v1932
  %2722 = vmatprep.subr.bf16.mxu0 0
  %2723 = vmatpush1.bf16.msra.mxu0 %v1933
  %2724 = vmatprep.subr.bf16.mxu0 0
  %2725 = vmatpush1.bf16.msra.mxu0 %v1934
  %2726 = vmatprep.subr.bf16.mxu0 0
  %2727 = vmatpush1.bf16.msra.mxu0 %v1935
  %2728 = vmatprep.mubr.bf16.mxu0 %v653
  %2729 = vmatmul.mubr.bf16.gmra.mrb[0].mxu0 %v651
  %v2730 = vpop.f32.mrb[0].mxu0
  %v2731 = vadd.f32 %v2691, %v2730
  %v2732 = vpop.f32.mrb[0].mxu0
  %v2733 = vpop.f32.mrb[0].mxu0
  %v2734 = vpop.f32.mrb[0].mxu0
  %2735 = vdwg.mxu0
  %2736 = vmatprep.subr.bf16.mxu0 0
  %2737 = vmatpush1.bf16.msra.mxu0 %v1936
  %2738 = vmatprep.subr.bf16.mxu0 0
  %2739 = vmatpush1.bf16.msra.mxu0 %v1937
  %2740 = vmatprep.subr.bf16.mxu0 0
  %2741 = vmatpush1.bf16.msra.mxu0 %v1938
  %2742 = vmatprep.subr.bf16.mxu0 0
  %2743 = vmatpush1.bf16.msra.mxu0 %v1939
  %2744 = vmatprep.subr.bf16.mxu0 0
  %2745 = vmatpush1.bf16.msra.mxu0 %v1940
  %2746 = vmatprep.subr.bf16.mxu0 0
  %2747 = vmatpush1.bf16.msra.mxu0 %v1941
  %2748 = vmatprep.subr.bf16.mxu0 0
  %2749 = vmatpush1.bf16.msra.mxu0 %v1942
  %2750 = vmatprep.subr.bf16.mxu0 0
  %2751 = vmatpush1.bf16.msra.mxu0 %v1943
  %2752 = vmatprep.subr.bf16.mxu0 0
  %2753 = vmatpush1.bf16.msra.mxu0 %v1944
  %2754 = vmatprep.subr.bf16.mxu0 0
  %2755 = vmatpush1.bf16.msra.mxu0 %v1945
  %2756 = vmatprep.subr.bf16.mxu0 0
  %2757 = vmatpush1.bf16.msra.mxu0 %v1946
  %2758 = vmatprep.subr.bf16.mxu0 0
  %2759 = vmatpush1.bf16.msra.mxu0 %v1947
  %2760 = vmatprep.subr.bf16.mxu0 0
  %2761 = vmatpush1.bf16.msra.mxu0 %v1948
  %2762 = vmatprep.subr.bf16.mxu0 0
  %2763 = vmatpush1.bf16.msra.mxu0 %v1949
  %2764 = vmatprep.subr.bf16.mxu0 0
  %2765 = vmatpush1.bf16.msra.mxu0 %v1950
  %2766 = vmatprep.subr.bf16.mxu0 0
  %2767 = vmatpush1.bf16.msra.mxu0 %v1951
  %2768 = vmatprep.mubr.bf16.mxu0 %v669
  %2769 = vmatmul.mubr.bf16.gmra.mrb[0].mxu0 %v661
  %v2770 = vpop.f32.mrb[0].mxu0
  %v2771 = vadd.f32 %v2731, %v2770
  %v2772 = vpop.f32.mrb[0].mxu0
  %v2773 = vpop.f32.mrb[0].mxu0
  %v2774 = vpop.f32.mrb[0].mxu0
  %2775 = vdwg.mxu0
  %2776 = vmatprep.subr.bf16.mxu0 0
  %2777 = vmatpush1.bf16.msra.mxu0 %v1952
  %2778 = vmatprep.subr.bf16.mxu0 0
  %2779 = vmatpush1.bf16.msra.mxu0 %v1953
  %2780 = vmatprep.subr.bf16.mxu0 0
  %2781 = vmatpush1.bf16.msra.mxu0 %v1954
  %2782 = vmatprep.subr.bf16.mxu0 0
  %2783 = vmatpush1.bf16.msra.mxu0 %v1955
  %2784 = vmatprep.subr.bf16.mxu0 0
  %2785 = vmatpush1.bf16.msra.mxu0 %v1956
  %2786 = vmatprep.subr.bf16.mxu0 0
  %2787 = vmatpush1.bf16.msra.mxu0 %v1957
  %2788 = vmatprep.subr.bf16.mxu0 0
  %2789 = vmatpush1.bf16.msra.mxu0 %v1958
  %2790 = vmatprep.subr.bf16.mxu0 0
  %2791 = vmatpush1.bf16.msra.mxu0 %v1959
  %2792 = vmatprep.subr.bf16.mxu0 0
  %2793 = vmatpush1.bf16.msra.mxu0 %v1960
  %2794 = vmatprep.subr.bf16.mxu0 0
  %2795 = vmatpush1.bf16.msra.mxu0 %v1961
  %2796 = vmatprep.subr.bf16.mxu0 0
  %2797 = vmatpush1.bf16.msra.mxu0 %v1962
  %2798 = vmatprep.subr.bf16.mxu0 0
  %2799 = vmatpush1.bf16.msra.mxu0 %v1963
  %2800 = vmatprep.subr.bf16.mxu0 0
  %2801 = vmatpush1.bf16.msra.mxu0 %v1964
  %2802 = vmatprep.subr.bf16.mxu0 0
  %2803 = vmatpush1.bf16.msra.mxu0 %v1965
  %2804 = vmatprep.subr.bf16.mxu0 0
  %2805 = vmatpush1.bf16.msra.mxu0 %v1966
  %2806 = vmatprep.subr.bf16.mxu0 0
  %2807 = vmatpush1.bf16.msra.mxu0 %v1967
  %2808 = vmatprep.mubr.bf16.mxu0 %v670
  %2809 = vmatmul.mubr.bf16.gmra.mrb[0].mxu0 %v668
  %v2810 = vpop.f32.mrb[0].mxu0
  %v2811 = vadd.f32 %v2771, %v2810
  %v2812 = vpop.f32.mrb[0].mxu0
  %v2813 = vpop.f32.mrb[0].mxu0
  %v2814 = vpop.f32.mrb[0].mxu0
  %2815 = vdwg.mxu0
  %2816 = vmatprep.subr.bf16.mxu0 0
  %2817 = vmatpush1.bf16.msra.mxu0 %v1968
  %2818 = vmatprep.subr.bf16.mxu0 0
  %2819 = vmatpush1.bf16.msra.mxu0 %v1969
  %2820 = vmatprep.subr.bf16.mxu0 0
  %2821 = vmatpush1.bf16.msra.mxu0 %v1970
  %2822 = vmatprep.subr.bf16.mxu0 0
  %2823 = vmatpush1.bf16.msra.mxu0 %v1971
  %2824 = vmatprep.subr.bf16.mxu0 0
  %2825 = vmatpush1.bf16.msra.mxu0 %v1972
  %2826 = vmatprep.subr.bf16.mxu0 0
  %2827 = vmatpush1.bf16.msra.mxu0 %v1973
  %2828 = vmatprep.subr.bf16.mxu0 0
  %2829 = vmatpush1.bf16.msra.mxu0 %v1974
  %2830 = vmatprep.subr.bf16.mxu0 0
  %2831 = vmatpush1.bf16.msra.mxu0 %v1975
  %2832 = vmatprep.subr.bf16.mxu0 0
  %2833 = vmatpush1.bf16.msra.mxu0 %v1976
  %2834 = vmatprep.subr.bf16.mxu0 0
  %2835 = vmatpush1.bf16.msra.mxu0 %v1977
  %2836 = vmatprep.subr.bf16.mxu0 0
  %2837 = vmatpush1.bf16.msra.mxu0 %v1978
  %2838 = vmatprep.subr.bf16.mxu0 0
  %2839 = vmatpush1.bf16.msra.mxu0 %v1979
  %2840 = vmatprep.subr.bf16.mxu0 0
  %2841 = vmatpush1.bf16.msra.mxu0 %v1980
  %2842 = vmatprep.subr.bf16.mxu0 0
  %2843 = vmatpush1.bf16.msra.mxu0 %v1981
  %2844 = vmatprep.subr.bf16.mxu0 0
  %2845 = vmatpush1.bf16.msra.mxu0 %v1982
  %2846 = vmatprep.subr.bf16.mxu0 0
  %2847 = vmatpush1.bf16.msra.mxu0 %v1983
  %2848 = vmatprep.mubr.bf16.mxu0 %v686
  %2849 = vmatmul.mubr.bf16.gmra.mrb[0].mxu0 %v678
  %v2850 = vpop.f32.mrb[0].mxu0
  %v2851 = vadd.f32 %v2811, %v2850
  %v2852 = vpop.f32.mrb[0].mxu0
  %v2853 = vpop.f32.mrb[0].mxu0
  %v2854 = vpop.f32.mrb[0].mxu0
  %2855 = vdwg.mxu0
  %2856 = vmatprep.subr.bf16.mxu0 0
  %2857 = vmatpush1.bf16.msra.mxu0 %v1984
  %2858 = vmatprep.subr.bf16.mxu0 0
  %2859 = vmatpush1.bf16.msra.mxu0 %v1985
  %2860 = vmatprep.subr.bf16.mxu0 0
  %2861 = vmatpush1.bf16.msra.mxu0 %v1986
  %2862 = vmatprep.subr.bf16.mxu0 0
  %2863 = vmatpush1.bf16.msra.mxu0 %v1987
  %2864 = vmatprep.subr.bf16.mxu0 0
  %2865 = vmatpush1.bf16.msra.mxu0 %v1988
  %2866 = vmatprep.subr.bf16.mxu0 0
  %2867 = vmatpush1.bf16.msra.mxu0 %v1989
  %2868 = vmatprep.subr.bf16.mxu0 0
  %2869 = vmatpush1.bf16.msra.mxu0 %v1990
  %2870 = vmatprep.subr.bf16.mxu0 0
  %2871 = vmatpush1.bf16.msra.mxu0 %v1991
  %2872 = vmatprep.subr.bf16.mxu0 0
  %2873 = vmatpush1.bf16.msra.mxu0 %v1992
  %2874 = vmatprep.subr.bf16.mxu0 0
  %2875 = vmatpush1.bf16.msra.mxu0 %v1993
  %2876 = vmatprep.subr.bf16.mxu0 0
  %2877 = vmatpush1.bf16.msra.mxu0 %v1994
  %2878 = vmatprep.subr.bf16.mxu0 0
  %2879 = vmatpush1.bf16.msra.mxu0 %v1995
  %2880 = vmatprep.subr.bf16.mxu0 0
  %2881 = vmatpush1.bf16.msra.mxu0 %v1996
  %2882 = vmatprep.subr.bf16.mxu0 0
  %2883 = vmatpush1.bf16.msra.mxu0 %v1997
  %2884 = vmatprep.subr.bf16.mxu0 0
  %2885 = vmatpush1.bf16.msra.mxu0 %v1998
  %2886 = vmatprep.subr.bf16.mxu0 0
  %2887 = vmatpush1.bf16.msra.mxu0 %v1999
  %2888 = vmatprep.mubr.bf16.mxu0 %v687
  %2889 = vmatmul.mubr.bf16.gmra.mrb[0].mxu0 %v685
  %v2890 = vpop.f32.mrb[0].mxu0
  %v2891 = vadd.f32 %v2851, %v2890
  %v2892 = vpop.f32.mrb[0].mxu0
  %v2893 = vpop.f32.mrb[0].mxu0
  %v2894 = vpop.f32.mrb[0].mxu0
  %2895 = vdwg.mxu0
  %vm2896 = vcmask 1043456
  %v2897 = vsel %vm2896, %v2891, 0.0
  %v2898 = vrot.slane %v2897, 4
  %v2899 = vadd.f32 %v2897, %v2898
  %v2900 = vrot.slane %v2899, 2
  %v2901 = vadd.f32 %v2899, %v2900
  %v2902 = vrot.slane %v2901, 1
  %v2903 = vadd.f32 %v2901, %v2902
  %v2904 = vrcp.pop 4.0
  %v2905 = vmul.f32 %v2903, %v2904
  %v2906 = vsub.f32 %v2891, %v2905
  %v2907 = vmul.f32 %v2906, %v2906
  %v2908 = vsel %vm2896, %v2907, 0.0
  %v2909 = vrot.slane %v2908, 4
  %v2910 = vadd.f32 %v2908, %v2909
  %v2911 = vrot.slane %v2910, 2
  %v2912 = vadd.f32 %v2910, %v2911
  %v2913 = vrot.slane %v2912, 1
  %v2914 = vadd.f32 %v2912, %v2913
  %v2915 = vmul.f32 %v2914, %v2904
  %v2916 = vadd.f32 %v2915, 1e-05
  %v2917 = vrsqrt.pop %v2916
  %v2918 = vmul.f32 %v2906, %v2917
  %v2919 = vld [vmem:[%s2] sm:$0x1]
  %v2921 = vlaneseq
  %v2922 = vshrl.u32 %v2921, 7
  %v2923 = vsub.s32 0, %v2922
  %v2924 = vrot.slane %v2919, %v2923
  %v2926 = vmul.f32 %v2918, %v2924
  %v2927 = vld [vmem:[%s3] sm:$0x1]
  %v2929 = vlaneseq
  %v2930 = vshrl.u32 %v2929, 7
  %v2931 = vsub.s32 0, %v2930
  %v2932 = vrot.slane %v2927, %v2931
  %v2934 = vadd.f32 %v2926, %v2932
  %vm2935 = vcmp.gt.f32.partialorder %v2934, 0.0
  %v2936 = vmul.f32 %v2934, 0.1
  %v2937 = vsel %vm2935, %v2934, %v2936
  %v2938 = vld [vmem:[%s4] sm:$0xff]
  %v2939 = vld [vmem:[%s4 + $0x8] sm:$0xff]
  %v2940 = vld [vmem:[%s4 + $0x10] sm:$0xff]
  %v2941 = vld [vmem:[%s4 + $0x18] sm:$0xff]
  %v2942 = vld [vmem:[%s4 + $0x20] sm:$0xff]
  %v2943 = vld [vmem:[%s4 + $0x28] sm:$0xff]
  %v2944 = vld [vmem:[%s4 + $0x30] sm:$0xff]
  %v2945 = vld [vmem:[%s4 + $0x38] sm:$0xff]
  %v2946 = vld [vmem:[%s4 + $0x40] sm:$0xff]
  %v2947 = vld [vmem:[%s4 + $0x48] sm:$0xff]
  %v2948 = vld [vmem:[%s4 + $0x50] sm:$0xff]
  %v2949 = vld [vmem:[%s4 + $0x58] sm:$0xff]
  %v2950 = vld [vmem:[%s4 + $0x60] sm:$0xff]
  %v2951 = vld [vmem:[%s4 + $0x68] sm:$0xff]
  %v2952 = vld [vmem:[%s4 + $0x70] sm:$0xff]
  %v2953 = vld [vmem:[%s4 + $0x78] sm:$0xff]
  %v2954 = vld [vmem:[%s5] sm:$0x1]
  %v2956 = vlaneseq
  %v2957 = vshrl.u32 %v2956, 7
  %v2958 = vsub.s32 0, %v2957
  %v2959 = vrot.slane %v2954, %v2958
  %2961 = vmatprep.subr.mxu0 0.0
  %2962 = vmatpush1.msra.mxu0 %v2938
  %2963 = vmatprep.subr.mxu0 0.0
  %2964 = vmatpush1.msra.mxu0 %v2939
  %2965 = vmatprep.subr.mxu0 0.0
  %2966 = vmatpush1.msra.mxu0 %v2940
  %2967 = vmatprep.subr.mxu0 0.0
  %2968 = vmatpush1.msra.mxu0 %v2941
  %2969 = vmatprep.subr.mxu0 0.0
  %2970 = vmatpush1.msra.mxu0 %v2942
  %2971 = vmatprep.subr.mxu0 0.0
  %2972 = vmatpush1.msra.mxu0 %v2943
  %2973 = vmatprep.subr.mxu0 0.0
  %2974 = vmatpush1.msra.mxu0 %v2944
  %2975 = vmatprep.subr.mxu0 0.0
  %2976 = vmatpush1.msra.mxu0 %v2945
  %2977 = vmatprep.subr.mxu0 0.0
  %2978 = vmatpush1.msra.mxu0 %v2946
  %2979 = vmatprep.subr.mxu0 0.0
  %2980 = vmatpush1.msra.mxu0 %v2947
  %2981 = vmatprep.subr.mxu0 0.0
  %2982 = vmatpush1.msra.mxu0 %v2948
  %2983 = vmatprep.subr.mxu0 0.0
  %2984 = vmatpush1.msra.mxu0 %v2949
  %2985 = vmatprep.subr.mxu0 0.0
  %2986 = vmatpush1.msra.mxu0 %v2950
  %2987 = vmatprep.subr.mxu0 0.0
  %2988 = vmatpush1.msra.mxu0 %v2951
  %2989 = vmatprep.subr.mxu0 0.0
  %2990 = vmatpush1.msra.mxu0 %v2952
  %2991 = vmatprep.subr.mxu0 0.0
  %2992 = vmatpush1.msra.mxu0 %v2953
  %2993 = vmatprep.subr.mxu0 0.0
  %2994 = vmatpush1.msra.mxu0 0.0
  %2995 = vmatprep.subr.mxu0 0.0
  %2996 = vmatpush1.msra.mxu0 0.0
  %2997 = vmatprep.subr.mxu0 0.0
  %2998 = vmatpush1.msra.mxu0 0.0
  %2999 = vmatprep.subr.mxu0 0.0
  %3000 = vmatpush1.msra.mxu0 0.0
  %3001 = vmatprep.subr.mxu0 0.0
  %3002 = vmatpush1.msra.mxu0 0.0
  %3003 = vmatprep.subr.mxu0 0.0
  %3004 = vmatpush1.msra.mxu0 0.0
  %3005 = vmatprep.subr.mxu0 0.0
  %3006 = vmatpush1.msra.mxu0 0.0
  %3007 = vmatprep.subr.mxu0 0.0
  %3008 = vmatpush1.msra.mxu0 0.0
  %3009 = vmatprep.subr.mxu0 0.0
  %3010 = vmatpush1.msra.mxu0 0.0
  %3011 = vmatprep.subr.mxu0 0.0
  %3012 = vmatpush1.msra.mxu0 0.0
  %3013 = vmatprep.subr.mxu0 0.0
  %3014 = vmatpush1.msra.mxu0 0.0
  %3015 = vmatprep.subr.mxu0 0.0
  %3016 = vmatpush1.msra.mxu0 0.0
  %3017 = vmatprep.subr.mxu0 0.0
  %3018 = vmatpush1.msra.mxu0 0.0
  %3019 = vmatprep.subr.mxu0 0.0
  %3020 = vmatpush1.msra.mxu0 0.0
  %3021 = vmatprep.subr.mxu0 0.0
  %3022 = vmatpush1.msra.mxu0 0.0
  %3023 = vmatprep.subr.mxu0 0.0
  %3024 = vmatpush1.msra.mxu0 0.0
  %3025 = vmatprep.mubr.f32.mxu0 0.0
  %3026 = vmatmul.mubr.f32.gmra.mrb[0].mxu0 %v2937
  %v3027 = vpop.f32.mrb[0].mxu0
  %v3028 = vadd.f32 %v2959, %v3027
  %v3029 = vpop.f32.mrb[0].mxu0
  %3030 = vdwg.mxu0
  %v3031 = vlaneseq
  %v3032 = vand.u32 %v3031, 127
  %vm3033 = vcmp.eq.s32.totalorder %v3032, 101
  %v3034 = vmul.f32 %v3028, 1.442695
  %v3035 = vpow.pop %v3034
  %v3036 = vsel %vm3033, %v3035, %v3028
  %3037 = vst [vmem:[%s6] sm:$0xf] %v3036
  // Predicated region
  $region26: #{qhead_forward.1} parent=0 // pred_check
    _
  $region27: #{qhead_forward.1} parent=0 // pred_check_branch
    %3039 = sbr.rel (0) target = $region29
  $region28: #{qhead_forward.1} parent=0 // pred_region
    _
  $region29: #{qhead_forward.1} parent=0 // pred_fallthru
    _
  // Predicated region
  $region30: #{qhead_forward.1} parent=0 // pred_check
    _
  $region31: #{qhead_forward.1} parent=0 // pred_check_branch
    %3041 = sbr.rel (0) target = $region33
  $region32: #{qhead_forward.1} parent=0 // pred_region
    _
  $region33: #{qhead_forward.1} parent=0 // pred_fallthru
    _

</llo_original>
